<compile_context>
chip_gen: v5e
topology: v5e:2x2
jax: 0.10.0
libtpu: 0.0.40
codegen_flags: <defaults>
</compile_context>

<pallas_src>
import jax
import jax.numpy as jnp
from jax.experimental import pallas as pl
from jax.experimental.pallas import tpu as pltpu

BN_EPS = 1e-5  # torch.nn.BatchNorm2d default


# --------------------------------------------------------------------------- #
# Fused branch2 kernel: 1x1 conv + BN + ReLU -> dw3x3 + BN -> 1x1 conv + BN + ReLU
# --------------------------------------------------------------------------- #
def _branch2_kernel(x_ref, w1_ref, s1_ref, b1_ref, wd_ref, s2_ref, b2_ref,
                    w3_ref, s3_ref, b3_ref, o_ref, pad_ref):
    _, H, W, C = x_ref.shape
    HW = H * W

    # ---- pointwise conv #1 (no bias) + folded BN1 + ReLU, on the MXU ----
    x = x_ref[0].reshape(HW, C)                       # (HW, C)
    y = jnp.dot(x, w1_ref[...], preferred_element_type=jnp.float32)
    y = jnp.maximum(y * s1_ref[...] + b1_ref[...], 0.0)

    # ---- depthwise 3x3, stride 1, pad 1, then folded BN2 (no ReLU) ----
    pad_ref[...] = jnp.zeros_like(pad_ref)            # zero halo
    pad_ref[pl.ds(1, H), pl.ds(1, W), :] = y.reshape(H, W, C)
    acc = pad_ref[pl.ds(0, H), pl.ds(0, W), :] * wd_ref[0]
    for k in range(1, 9):
        dy, dx = k // 3, k % 3
        acc = acc + pad_ref[pl.ds(dy, H), pl.ds(dx, W), :] * wd_ref[k]
    z = acc * s2_ref[...] + b2_ref[...]               # (H, W, C)

    # ---- pointwise conv #2 (no bias) + folded BN3 + ReLU ----
    o = jnp.dot(z.reshape(HW, C), w3_ref[...], preferred_element_type=jnp.float32)
    o = jnp.maximum(o * s3_ref[...] + b3_ref[...], 0.0)
    o_ref[0] = o.reshape(H, W, C).astype(o_ref.dtype)


def _branch2_pallas(x2, w1, s1, b1, wd, s2, b2, w3, s3, b3):
    """x2: (B, H, W, C) NHWC.  Returns branch2(x2): (B, H, W, C)."""
    B, H, W, C = x2.shape
    # TPU tiling: keep W a multiple of 8 (sublanes) and C a multiple of 128
    # (lanes) so reshapes/stores are lane-dense and unmasked.
    assert W % 8 == 0 and C % 128 == 0, "pad W to 8 and channels to 128"
    HW = H * W
    itemsize = x2.dtype.itemsize

    flops = B * (4 * HW * C * C + 18 * HW * C + 8 * HW * C)
    bytes_accessed = 2 * B * HW * C * itemsize + (2 * C * C + 15 * C) * 4

    const = lambda b: (0, 0)
    return pl.pallas_call(
        _branch2_kernel,
        out_shape=jax.ShapeDtypeStruct((B, H, W, C), x2.dtype),
        grid=(B,),
        in_specs=[
            pl.BlockSpec((1, H, W, C), lambda b: (b, 0, 0, 0)),   # x2 image
            pl.BlockSpec((C, C), const),                          # W1 (Cin, Cout)
            pl.BlockSpec((1, C), const),                          # BN1 scale
            pl.BlockSpec((1, C), const),                          # BN1 shift
            pl.BlockSpec((9, 1, C), lambda b: (0, 0, 0)),         # dw taps
            pl.BlockSpec((1, C), const),                          # BN2 scale
            pl.BlockSpec((1, C), const),                          # BN2 shift
            pl.BlockSpec((C, C), const),                          # W3 (Cin, Cout)
            pl.BlockSpec((1, C), const),                          # BN3 scale
            pl.BlockSpec((1, C), const),                          # BN3 shift
        ],
        out_specs=pl.BlockSpec((1, H, W, C), lambda b: (b, 0, 0, 0)),
        scratch_shapes=[pltpu.VMEM((H + 2, W + 2, C), jnp.float32)],
        compiler_params=pltpu.CompilerParams(
            dimension_semantics=("parallel",)),
        cost_estimate=pl.CostEstimate(
            flops=flops, transcendentals=0, bytes_accessed=bytes_accessed),
    )(x2, w1, s1, b1, wd, s2, b2, w3, s3, b3)


# --------------------------------------------------------------------------- #
# Module wrapper (branch == 1, stride == 1)
# --------------------------------------------------------------------------- #
def _fold_bn(gamma, beta, mean, var, eps=BN_EPS):
    scale = gamma / jnp.sqrt(var + eps)
    shift = beta - mean * scale
    return scale.reshape(1, -1), shift.reshape(1, -1)


def shufflenet_invres_forward(x, w1_oihw, bn1, wd_oihw, bn2, w3_oihw, bn3):
    """ShuffleNetInvRes forward (branch=1, stride=1).  x: (B, C, H, W) NCHW."""
    B, Cin, H, W = x.shape
    C = Cin // 2

    x_nhwc = jnp.transpose(x, (0, 2, 3, 1))            # NCHW -> NHWC
    x1 = x_nhwc[..., :C]                                # passthrough half
    x2 = x_nhwc[..., C:]                                # branch2 half

    # Fold conv weights / BN stats into kernel-friendly forms (once, outside).
    w1 = jnp.transpose(w1_oihw[:, :, 0, 0])             # (Cin, Cout) for x @ w
    w3 = jnp.transpose(w3_oihw[:, :, 0, 0])
    wd = jnp.transpose(wd_oihw[:, 0, :, :], (1, 2, 0)).reshape(9, 1, C)
    s1, b1 = _fold_bn(*bn1)
    s2, b2 = _fold_bn(*bn2)
    s3, b3 = _fold_bn(*bn3)

    y2 = _branch2_pallas(x2, w1, s1, b1, wd, s2, b2, w3, s3, b3)

    # concat((x1, y2), dim=C) followed by channel shuffle with groups=2 is an
    # interleave of the two halves: out[..., 2k] = x1[..., k], out[..., 2k+1] =
    # y2[..., k].  Pure lane permutation -> done once in XLA.
    out = jnp.stack([x1, y2], axis=-1).reshape(B, H, W, 2 * C)
    return jnp.transpose(out, (0, 3, 1, 2))             # back to NCHW


# --------------------------------------------------------------------------- #
# Pure-JAX reference (independent code path: XLA grouped conv)
# --------------------------------------------------------------------------- #
def shufflenet_invres_reference(x, w1, bn1, wd, bn2, w3, bn3):
    def bn(v, p):
        g, b, m, var = p
        return (v - m) * (g / jnp.sqrt(var + BN_EPS)) + b

    B, Cin, H, W = x.shape
    C = Cin // 2
    xh = jnp.transpose(x, (0, 2, 3, 1)).astype(jnp.float32)
    x1, x2 = xh[..., :C], xh[..., C:]

    y = jnp.einsum('bhwi,oi->bhwo', x2, w1[:, :, 0, 0],
                   precision=jax.lax.Precision.HIGHEST)
    y = jax.nn.relu(bn(y, bn1))
    w_hwio = jnp.transpose(wd, (2, 3, 1, 0))            # (3, 3, 1, C)
    y = jax.lax.conv_general_dilated(
        y, w_hwio, window_strides=(1, 1), padding=((1, 1), (1, 1)),
        dimension_numbers=('NHWC', 'HWIO', 'NHWC'), feature_group_count=C,
        precision=jax.lax.Precision.HIGHEST)
    y = bn(y, bn2)
    y = jnp.einsum('bhwi,oi->bhwo', y, w3[:, :, 0, 0],
                   precision=jax.lax.Precision.HIGHEST)
    y = jax.nn.relu(bn(y, bn3))

    out = jnp.stack([x1, y], axis=-1).reshape(B, H, W, 2 * C)
    return jnp.transpose(out, (0, 3, 1, 2))


# --------------------------------------------------------------------------- #
if __name__ == "__main__":
    # Small but TPU-friendly shapes: inp = oup = 256 -> oup_inc = 128 (lane
    # dense), spatial 16x16 -> 256 matmul rows per grid step, batch 2.
    B, Cin, H, W = 2, 256, 16, 16
    C = Cin // 2

    key = jax.random.PRNGKey(0)
    keys = jax.random.split(key, 8)

    x = jax.random.normal(keys[0], (B, Cin, H, W), dtype=jnp.float32)
    w1 = jax.random.normal(keys[1], (C, C, 1, 1), jnp.float32) / jnp.sqrt(C)
    wd = jax.random.normal(keys[2], (C, 1, 3, 3), jnp.float32) * 0.2
    w3 = jax.random.normal(keys[3], (C, C, 1, 1), jnp.float32) / jnp.sqrt(C)

    def bn_params(k):
        k1, k2, k3, k4 = jax.random.split(k, 4)
        gamma = 1.0 + 0.1 * jax.random.normal(k1, (C,), jnp.float32)
        beta = 0.1 * jax.random.normal(k2, (C,), jnp.float32)
        mean = 0.1 * jax.random.normal(k3, (C,), jnp.float32)
        var = 0.5 + jax.random.uniform(k4, (C,), jnp.float32)
        return gamma, beta, mean, var

    bn1 = bn_params(keys[4])
    bn2 = bn_params(keys[5])
    bn3 = bn_params(keys[6])

    forward = jax.jit(shufflenet_invres_forward)
    out = forward(x, w1, bn1, wd, bn2, w3, bn3)
    out = jax.block_until_ready(out)

    ref = shufflenet_invres_reference(x, w1, bn1, wd, bn2, w3, bn3)

    assert out.shape == (B, Cin, H, W)
    assert jnp.allclose(out, ref, atol=2e-3, rtol=2e-3), \
        float(jnp.max(jnp.abs(out - ref)))

    print("KERNEL_OK")
</pallas_src>

<mosaic_0001>
module attributes {stable_mosaic.version = 11 : i64} {
  func.func @_branch2_kernel(%arg0: i32, %arg1: memref<1x16x16x128xf32, #tpu.memory_space<vmem>>, %arg2: memref<128x128xf32, #tpu.memory_space<vmem>>, %arg3: memref<1x128xf32, #tpu.memory_space<vmem>>, %arg4: memref<1x128xf32, #tpu.memory_space<vmem>>, %arg5: memref<9x1x128xf32, #tpu.memory_space<vmem>>, %arg6: memref<1x128xf32, #tpu.memory_space<vmem>>, %arg7: memref<1x128xf32, #tpu.memory_space<vmem>>, %arg8: memref<128x128xf32, #tpu.memory_space<vmem>>, %arg9: memref<1x128xf32, #tpu.memory_space<vmem>>, %arg10: memref<1x128xf32, #tpu.memory_space<vmem>>, %arg11: memref<1x16x16x128xf32, #tpu.memory_space<vmem>>, %arg12: memref<18x18x128xf32, #tpu.memory_space<vmem>>) attributes {dimension_semantics = [#tpu.dimension_semantics<parallel>], iteration_bounds = array<i64: 2>, scalar_prefetch = 0 : i64, scratch_operands = 1 : i64, tpu.core_type = #tpu.core_type<tc>, window_params = [{transform_indices = @transform_0, window_bounds = array<i64: 1, 16, 16, 128>}, {pipeline_mode = #tpu.pipeline_mode<synchronous>, transform_indices = @transform_1, window_bounds = array<i64: 128, 128>}, {pipeline_mode = #tpu.pipeline_mode<synchronous>, transform_indices = @transform_2, window_bounds = array<i64: 1, 128>}, {pipeline_mode = #tpu.pipeline_mode<synchronous>, transform_indices = @transform_3, window_bounds = array<i64: 1, 128>}, {pipeline_mode = #tpu.pipeline_mode<synchronous>, transform_indices = @transform_4, window_bounds = array<i64: 9, 1, 128>}, {pipeline_mode = #tpu.pipeline_mode<synchronous>, transform_indices = @transform_5, window_bounds = array<i64: 1, 128>}, {pipeline_mode = #tpu.pipeline_mode<synchronous>, transform_indices = @transform_6, window_bounds = array<i64: 1, 128>}, {pipeline_mode = #tpu.pipeline_mode<synchronous>, transform_indices = @transform_7, window_bounds = array<i64: 128, 128>}, {pipeline_mode = #tpu.pipeline_mode<synchronous>, transform_indices = @transform_8, window_bounds = array<i64: 1, 128>}, {pipeline_mode = #tpu.pipeline_mode<synchronous>, transform_indices = @transform_9, window_bounds = array<i64: 1, 128>}, {transform_indices = @transform_10, window_bounds = array<i64: 1, 16, 16, 128>}]} {
    %c0 = arith.constant 0 : index
    %c0_0 = arith.constant 0 : index
    %c0_1 = arith.constant 0 : index
    %c0_2 = arith.constant 0 : index
    %0 = vector.load %arg1[%c0, %c0_0, %c0_1, %c0_2] : memref<1x16x16x128xf32, #tpu.memory_space<vmem>>, vector<1x16x16x128xf32>
    %1 = vector.shape_cast %0 : vector<1x16x16x128xf32> to vector<16x16x128xf32>
    %2 = vector.shape_cast %1 : vector<16x16x128xf32> to vector<256x128xf32>
    %c0_3 = arith.constant 0 : index
    %c0_4 = arith.constant 0 : index
    %3 = vector.load %arg2[%c0_3, %c0_4] : memref<128x128xf32, #tpu.memory_space<vmem>>, vector<128x128xf32>
    %cst = arith.constant dense<0.000000e+00> : vector<256x128xf32>
    %4 = tpu.matmul %2, %3, %cst {dimension_numbers = #tpu.dot_dimension_numbers<[1], [0], [0], [1], [0, 0, 1, 1], [], []>} : vector<256x128xf32>, vector<128x128xf32>, vector<256x128xf32> -> vector<256x128xf32>
    %c0_5 = arith.constant 0 : index
    %c0_6 = arith.constant 0 : index
    %5 = vector.load %arg3[%c0_5, %c0_6] : memref<1x128xf32, #tpu.memory_space<vmem>>, vector<1x128xf32>
    %6 = vector.broadcast %5 : vector<1x128xf32> to vector<256x128xf32>
    %7 = arith.mulf %4, %6 : vector<256x128xf32>
    %c0_7 = arith.constant 0 : index
    %c0_8 = arith.constant 0 : index
    %8 = vector.load %arg4[%c0_7, %c0_8] : memref<1x128xf32, #tpu.memory_space<vmem>>, vector<1x128xf32>
    %9 = vector.broadcast %8 : vector<1x128xf32> to vector<256x128xf32>
    %10 = arith.addf %7, %9 : vector<256x128xf32>
    %cst_9 = arith.constant 0.000000e+00 : f32
    %11 = vector.broadcast %cst_9 : f32 to vector<256x128xf32>
    %12 = arith.maximumf %10, %11 : vector<256x128xf32>
    %cst_10 = arith.constant 0.000000e+00 : f32
    %13 = vector.broadcast %cst_10 : f32 to vector<18x18x128xf32>
    %c0_11 = arith.constant 0 : index
    %c0_12 = arith.constant 0 : index
    %c0_13 = arith.constant 0 : index
    %14 = vector.load %arg12[%c0_11, %c0_12, %c0_13] : memref<18x18x128xf32, #tpu.memory_space<vmem>>, vector<18x18x128xf32>
    tpu.vector_store %arg12[%c0_11, %c0_12, %c0_13], %13 {strides = array<i32>} : memref<18x18x128xf32, #tpu.memory_space<vmem>>, vector<18x18x128xf32>,
    %15 = vector.shape_cast %12 : vector<256x128xf32> to vector<16x16x128xf32>
    %c1 = arith.constant 1 : index
    %c1_14 = arith.constant 1 : index
    %c0_15 = arith.constant 0 : index
    %16 = vector.load %arg12[%c1, %c1_14, %c0_15] : memref<18x18x128xf32, #tpu.memory_space<vmem>>, vector<16x16x128xf32>
    tpu.vector_store %arg12[%c1, %c1_14, %c0_15], %15 {strides = array<i32>} : memref<18x18x128xf32, #tpu.memory_space<vmem>>, vector<16x16x128xf32>,
    %c0_16 = arith.constant 0 : index
    %c0_17 = arith.constant 0 : index
    %c0_18 = arith.constant 0 : index
    %17 = vector.load %arg12[%c0_16, %c0_17, %c0_18] : memref<18x18x128xf32, #tpu.memory_space<vmem>>, vector<16x16x128xf32>
    %c0_19 = arith.constant 0 : index
    %c0_20 = arith.constant 0 : index
    %c0_21 = arith.constant 0 : index
    %18 = vector.load %arg5[%c0_19, %c0_20, %c0_21] : memref<9x1x128xf32, #tpu.memory_space<vmem>>, vector<1x1x128xf32>
    %19 = vector.shape_cast %18 : vector<1x1x128xf32> to vector<1x128xf32>
    %20 = vector.shape_cast %19 : vector<1x128xf32> to vector<1x1x128xf32>
    %21 = vector.broadcast %20 : vector<1x1x128xf32> to vector<16x16x128xf32>
    %22 = arith.mulf %17, %21 : vector<16x16x128xf32>
    %c0_22 = arith.constant 0 : index
    %c1_23 = arith.constant 1 : index
    %c0_24 = arith.constant 0 : index
    %23 = vector.load %arg12[%c0_22, %c1_23, %c0_24] : memref<18x18x128xf32, #tpu.memory_space<vmem>>, vector<16x16x128xf32>
    %c1_25 = arith.constant 1 : index
    %c0_26 = arith.constant 0 : index
    %c0_27 = arith.constant 0 : index
    %24 = vector.load %arg5[%c1_25, %c0_26, %c0_27] : memref<9x1x128xf32, #tpu.memory_space<vmem>>, vector<1x1x128xf32>
    %25 = vector.shape_cast %24 : vector<1x1x128xf32> to vector<1x128xf32>
    %26 = vector.shape_cast %25 : vector<1x128xf32> to vector<1x1x128xf32>
    %27 = vector.broadcast %26 : vector<1x1x128xf32> to vector<16x16x128xf32>
    %28 = arith.mulf %23, %27 : vector<16x16x128xf32>
    %29 = arith.addf %22, %28 : vector<16x16x128xf32>
    %c0_28 = arith.constant 0 : index
    %c2 = arith.constant 2 : index
    %c0_29 = arith.constant 0 : index
    %30 = vector.load %arg12[%c0_28, %c2, %c0_29] : memref<18x18x128xf32, #tpu.memory_space<vmem>>, vector<16x16x128xf32>
    %c2_30 = arith.constant 2 : index
    %c0_31 = arith.constant 0 : index
    %c0_32 = arith.constant 0 : index
    %31 = vector.load %arg5[%c2_30, %c0_31, %c0_32] : memref<9x1x128xf32, #tpu.memory_space<vmem>>, vector<1x1x128xf32>
    %32 = vector.shape_cast %31 : vector<1x1x128xf32> to vector<1x128xf32>
    %33 = vector.shape_cast %32 : vector<1x128xf32> to vector<1x1x128xf32>
    %34 = vector.broadcast %33 : vector<1x1x128xf32> to vector<16x16x128xf32>
    %35 = arith.mulf %30, %34 : vector<16x16x128xf32>
    %36 = arith.addf %29, %35 : vector<16x16x128xf32>
    %c1_33 = arith.constant 1 : index
    %c0_34 = arith.constant 0 : index
    %c0_35 = arith.constant 0 : index
    %37 = vector.load %arg12[%c1_33, %c0_34, %c0_35] : memref<18x18x128xf32, #tpu.memory_space<vmem>>, vector<16x16x128xf32>
    %c3 = arith.constant 3 : index
    %c0_36 = arith.constant 0 : index
    %c0_37 = arith.constant 0 : index
    %38 = vector.load %arg5[%c3, %c0_36, %c0_37] : memref<9x1x128xf32, #tpu.memory_space<vmem>>, vector<1x1x128xf32>
    %39 = vector.shape_cast %38 : vector<1x1x128xf32> to vector<1x128xf32>
    %40 = vector.shape_cast %39 : vector<1x128xf32> to vector<1x1x128xf32>
    %41 = vector.broadcast %40 : vector<1x1x128xf32> to vector<16x16x128xf32>
    %42 = arith.mulf %37, %41 : vector<16x16x128xf32>
    %43 = arith.addf %36, %42 : vector<16x16x128xf32>
    %c1_38 = arith.constant 1 : index
    %c1_39 = arith.constant 1 : index
    %c0_40 = arith.constant 0 : index
    %44 = vector.load %arg12[%c1_38, %c1_39, %c0_40] : memref<18x18x128xf32, #tpu.memory_space<vmem>>, vector<16x16x128xf32>
    %c4 = arith.constant 4 : index
    %c0_41 = arith.constant 0 : index
    %c0_42 = arith.constant 0 : index
    %45 = vector.load %arg5[%c4, %c0_41, %c0_42] : memref<9x1x128xf32, #tpu.memory_space<vmem>>, vector<1x1x128xf32>
    %46 = vector.shape_cast %45 : vector<1x1x128xf32> to vector<1x128xf32>
    %47 = vector.shape_cast %46 : vector<1x128xf32> to vector<1x1x128xf32>
    %48 = vector.broadcast %47 : vector<1x1x128xf32> to vector<16x16x128xf32>
    %49 = arith.mulf %44, %48 : vector<16x16x128xf32>
    %50 = arith.addf %43, %49 : vector<16x16x128xf32>
    %c1_43 = arith.constant 1 : index
    %c2_44 = arith.constant 2 : index
    %c0_45 = arith.constant 0 : index
    %51 = vector.load %arg12[%c1_43, %c2_44, %c0_45] : memref<18x18x128xf32, #tpu.memory_space<vmem>>, vector<16x16x128xf32>
    %c5 = arith.constant 5 : index
    %c0_46 = arith.constant 0 : index
    %c0_47 = arith.constant 0 : index
    %52 = vector.load %arg5[%c5, %c0_46, %c0_47] : memref<9x1x128xf32, #tpu.memory_space<vmem>>, vector<1x1x128xf32>
    %53 = vector.shape_cast %52 : vector<1x1x128xf32> to vector<1x128xf32>
    %54 = vector.shape_cast %53 : vector<1x128xf32> to vector<1x1x128xf32>
    %55 = vector.broadcast %54 : vector<1x1x128xf32> to vector<16x16x128xf32>
    %56 = arith.mulf %51, %55 : vector<16x16x128xf32>
    %57 = arith.addf %50, %56 : vector<16x16x128xf32>
    %c2_48 = arith.constant 2 : index
    %c0_49 = arith.constant 0 : index
    %c0_50 = arith.constant 0 : index
    %58 = vector.load %arg12[%c2_48, %c0_49, %c0_50] : memref<18x18x128xf32, #tpu.memory_space<vmem>>, vector<16x16x128xf32>
    %c6 = arith.constant 6 : index
    %c0_51 = arith.constant 0 : index
    %c0_52 = arith.constant 0 : index
    %59 = vector.load %arg5[%c6, %c0_51, %c0_52] : memref<9x1x128xf32, #tpu.memory_space<vmem>>, vector<1x1x128xf32>
    %60 = vector.shape_cast %59 : vector<1x1x128xf32> to vector<1x128xf32>
    %61 = vector.shape_cast %60 : vector<1x128xf32> to vector<1x1x128xf32>
    %62 = vector.broadcast %61 : vector<1x1x128xf32> to vector<16x16x128xf32>
    %63 = arith.mulf %58, %62 : vector<16x16x128xf32>
    %64 = arith.addf %57, %63 : vector<16x16x128xf32>
    %c2_53 = arith.constant 2 : index
    %c1_54 = arith.constant 1 : index
    %c0_55 = arith.constant 0 : index
    %65 = vector.load %arg12[%c2_53, %c1_54, %c0_55] : memref<18x18x128xf32, #tpu.memory_space<vmem>>, vector<16x16x128xf32>
    %c7 = arith.constant 7 : index
    %c0_56 = arith.constant 0 : index
    %c0_57 = arith.constant 0 : index
    %66 = vector.load %arg5[%c7, %c0_56, %c0_57] : memref<9x1x128xf32, #tpu.memory_space<vmem>>, vector<1x1x128xf32>
    %67 = vector.shape_cast %66 : vector<1x1x128xf32> to vector<1x128xf32>
    %68 = vector.shape_cast %67 : vector<1x128xf32> to vector<1x1x128xf32>
    %69 = vector.broadcast %68 : vector<1x1x128xf32> to vector<16x16x128xf32>
    %70 = arith.mulf %65, %69 : vector<16x16x128xf32>
    %71 = arith.addf %64, %70 : vector<16x16x128xf32>
    %c2_58 = arith.constant 2 : index
    %c2_59 = arith.constant 2 : index
    %c0_60 = arith.constant 0 : index
    %72 = vector.load %arg12[%c2_58, %c2_59, %c0_60] : memref<18x18x128xf32, #tpu.memory_space<vmem>>, vector<16x16x128xf32>
    %c8 = arith.constant 8 : index
    %c0_61 = arith.constant 0 : index
    %c0_62 = arith.constant 0 : index
    %73 = vector.load %arg5[%c8, %c0_61, %c0_62] : memref<9x1x128xf32, #tpu.memory_space<vmem>>, vector<1x1x128xf32>
    %74 = vector.shape_cast %73 : vector<1x1x128xf32> to vector<1x128xf32>
    %75 = vector.shape_cast %74 : vector<1x128xf32> to vector<1x1x128xf32>
    %76 = vector.broadcast %75 : vector<1x1x128xf32> to vector<16x16x128xf32>
    %77 = arith.mulf %72, %76 : vector<16x16x128xf32>
    %78 = arith.addf %71, %77 : vector<16x16x128xf32>
    %c0_63 = arith.constant 0 : index
    %c0_64 = arith.constant 0 : index
    %79 = vector.load %arg6[%c0_63, %c0_64] : memref<1x128xf32, #tpu.memory_space<vmem>>, vector<1x128xf32>
    %80 = vector.shape_cast %79 : vector<1x128xf32> to vector<1x1x128xf32>
    %81 = vector.broadcast %80 : vector<1x1x128xf32> to vector<16x16x128xf32>
    %82 = arith.mulf %78, %81 : vector<16x16x128xf32>
    %c0_65 = arith.constant 0 : index
    %c0_66 = arith.constant 0 : index
    %83 = vector.load %arg7[%c0_65, %c0_66] : memref<1x128xf32, #tpu.memory_space<vmem>>, vector<1x128xf32>
    %84 = vector.shape_cast %83 : vector<1x128xf32> to vector<1x1x128xf32>
    %85 = vector.broadcast %84 : vector<1x1x128xf32> to vector<16x16x128xf32>
    %86 = arith.addf %82, %85 : vector<16x16x128xf32>
    %87 = vector.shape_cast %86 : vector<16x16x128xf32> to vector<256x128xf32>
    %c0_67 = arith.constant 0 : index
    %c0_68 = arith.constant 0 : index
    %88 = vector.load %arg8[%c0_67, %c0_68] : memref<128x128xf32, #tpu.memory_space<vmem>>, vector<128x128xf32>
    %cst_69 = arith.constant dense<0.000000e+00> : vector<256x128xf32>
    %89 = tpu.matmul %87, %88, %cst_69 {dimension_numbers = #tpu.dot_dimension_numbers<[1], [0], [0], [1], [0, 0, 1, 1], [], []>} : vector<256x128xf32>, vector<128x128xf32>, vector<256x128xf32> -> vector<256x128xf32>
    %c0_70 = arith.constant 0 : index
    %c0_71 = arith.constant 0 : index
    %90 = vector.load %arg9[%c0_70, %c0_71] : memref<1x128xf32, #tpu.memory_space<vmem>>, vector<1x128xf32>
    %91 = vector.broadcast %90 : vector<1x128xf32> to vector<256x128xf32>
    %92 = arith.mulf %89, %91 : vector<256x128xf32>
    %c0_72 = arith.constant 0 : index
    %c0_73 = arith.constant 0 : index
    %93 = vector.load %arg10[%c0_72, %c0_73] : memref<1x128xf32, #tpu.memory_space<vmem>>, vector<1x128xf32>
    %94 = vector.broadcast %93 : vector<1x128xf32> to vector<256x128xf32>
    %95 = arith.addf %92, %94 : vector<256x128xf32>
    %cst_74 = arith.constant 0.000000e+00 : f32
    %96 = vector.broadcast %cst_74 : f32 to vector<256x128xf32>
    %97 = arith.maximumf %95, %96 : vector<256x128xf32>
    %98 = vector.shape_cast %97 : vector<256x128xf32> to vector<16x16x128xf32>
    %c0_75 = arith.constant 0 : index
    %c0_76 = arith.constant 0 : index
    %c0_77 = arith.constant 0 : index
    %c0_78 = arith.constant 0 : index
    %99 = vector.load %arg11[%c0_75, %c0_76, %c0_77, %c0_78] : memref<1x16x16x128xf32, #tpu.memory_space<vmem>>, vector<1x16x16x128xf32>
    %100 = vector.shape_cast %99 : vector<1x16x16x128xf32> to vector<16x16x128xf32>
    %101 = vector.shape_cast %98 : vector<16x16x128xf32> to vector<1x16x16x128xf32>
    tpu.vector_store %arg11[%c0_75, %c0_76, %c0_77, %c0_78], %101 {strides = array<i32>} : memref<1x16x16x128xf32, #tpu.memory_space<vmem>>, vector<1x16x16x128xf32>,
    return
  }
  func.func @transform_0(%arg0: i32) -> (i32, i32, i32, i32) {
    %c0_i32 = arith.constant 0 : i32
    %c0_i32_0 = arith.constant 0 : i32
    %c0_i32_1 = arith.constant 0 : i32
    %c0_i32_2 = arith.constant 0 : i32
    return %arg0, %c0_i32, %c0_i32_0, %c0_i32_1 : i32, i32, i32, i32
  }
  func.func @transform_1(%arg0: i32) -> (i32, i32) {
    %c0_i32 = arith.constant 0 : i32
    %c0_i32_0 = arith.constant 0 : i32
    %c0_i32_1 = arith.constant 0 : i32
    return %c0_i32, %c0_i32_0 : i32, i32
  }
  func.func @transform_2(%arg0: i32) -> (i32, i32) {
    %c0_i32 = arith.constant 0 : i32
    %c0_i32_0 = arith.constant 0 : i32
    %c0_i32_1 = arith.constant 0 : i32
    return %c0_i32, %c0_i32_0 : i32, i32
  }
  func.func @transform_3(%arg0: i32) -> (i32, i32) {
    %c0_i32 = arith.constant 0 : i32
    %c0_i32_0 = arith.constant 0 : i32
    %c0_i32_1 = arith.constant 0 : i32
    return %c0_i32, %c0_i32_0 : i32, i32
  }
  func.func @transform_4(%arg0: i32) -> (i32, i32, i32) {
    %c0_i32 = arith.constant 0 : i32
    %c0_i32_0 = arith.constant 0 : i32
    %c0_i32_1 = arith.constant 0 : i32
    %c0_i32_2 = arith.constant 0 : i32
    return %c0_i32, %c0_i32_0, %c0_i32_1 : i32, i32, i32
  }
  func.func @transform_5(%arg0: i32) -> (i32, i32) {
    %c0_i32 = arith.constant 0 : i32
    %c0_i32_0 = arith.constant 0 : i32
    %c0_i32_1 = arith.constant 0 : i32
    return %c0_i32, %c0_i32_0 : i32, i32
  }
  func.func @transform_6(%arg0: i32) -> (i32, i32) {
    %c0_i32 = arith.constant 0 : i32
    %c0_i32_0 = arith.constant 0 : i32
    %c0_i32_1 = arith.constant 0 : i32
    return %c0_i32, %c0_i32_0 : i32, i32
  }
  func.func @transform_7(%arg0: i32) -> (i32, i32) {
    %c0_i32 = arith.constant 0 : i32
    %c0_i32_0 = arith.constant 0 : i32
    %c0_i32_1 = arith.constant 0 : i32
    return %c0_i32, %c0_i32_0 : i32, i32
  }
  func.func @transform_8(%arg0: i32) -> (i32, i32) {
    %c0_i32 = arith.constant 0 : i32
    %c0_i32_0 = arith.constant 0 : i32
    %c0_i32_1 = arith.constant 0 : i32
    return %c0_i32, %c0_i32_0 : i32, i32
  }
  func.func @transform_9(%arg0: i32) -> (i32, i32) {
    %c0_i32 = arith.constant 0 : i32
    %c0_i32_0 = arith.constant 0 : i32
    %c0_i32_1 = arith.constant 0 : i32
    return %c0_i32, %c0_i32_0 : i32, i32
  }
  func.func @transform_10(%arg0: i32) -> (i32, i32, i32, i32) {
    %c0_i32 = arith.constant 0 : i32
    %c0_i32_0 = arith.constant 0 : i32
    %c0_i32_1 = arith.constant 0 : i32
    %c0_i32_2 = arith.constant 0 : i32
    return %arg0, %c0_i32, %c0_i32_0, %c0_i32_1 : i32, i32, i32, i32
  }
}

</mosaic_0001>

<llo_original>
// kernel: shufflenet_invres_forward.1
$region0: #{shufflenet_invres_forward.1}
  #allocation0 [shape = 'u32[]', space=smem, size = 0x4, offset = 0x4, fixed_abs, tag = 'smem constant byte address 0x4 - core index']
  #allocation1 [shape = 'u32[72,128]{1,0:T(1,128)}', space=vmem, size = 0x9000, scoped, tag = 'internal scratch']
  #allocation2 [shape = 'f32[18,18,128]{2,1,0:T(8,128)}', space=vmem, size = 0x36000, scoped, tag = 'scratch operand']
  %s0 = inlined_call_operand.vmem [shape: f32[2,16,16,128], index: 0, kind: input, shape index: {}]
  %s1 = inlined_call_operand.vmem [shape: f32[128,128], index: 1, kind: input, shape index: {}]
  %s2 = inlined_call_operand.vmem [shape: f32[1,128], index: 2, kind: input, shape index: {}]
  %s3 = inlined_call_operand.vmem [shape: f32[1,128], index: 3, kind: input, shape index: {}]
  %s4 = inlined_call_operand.vmem [shape: f32[9,1,128], index: 4, kind: input, shape index: {}]
  %s5 = inlined_call_operand.vmem [shape: f32[1,128], index: 5, kind: input, shape index: {}]
  %s6 = inlined_call_operand.vmem [shape: f32[1,128], index: 6, kind: input, shape index: {}]
  %s7 = inlined_call_operand.vmem [shape: f32[128,128], index: 7, kind: input, shape index: {}]
  %s8 = inlined_call_operand.vmem [shape: f32[1,128], index: 8, kind: input, shape index: {}]
  %s9 = inlined_call_operand.vmem [shape: f32[1,128], index: 9, kind: input, shape index: {}]
  %s10 = inlined_call_operand.vmem [shape: f32[2,16,16,128], index: 10, kind: output, shape index: {}]
  %s11 = sld [smem:[#allocation0]]
  $region73: #{shufflenet_invres_forward.1} parent=0
    _
  %s13 = ssub.s32 1, %s11
  %s14 = scalar_select 0, %s13, %s11
  loop: start=0, step=1, limit=4
  $region2: #{shufflenet_invres_forward.1} parent=0 // loop_pre_header
    _
  $region3: #{shufflenet_invres_forward.1} parent=0 // loop_header
    %s16 = sphi 0, %s20
    %p17 = scmp.ge.s32.totalorder %s16, 4
    %s26 = sphi 0, %s28
    %s29 = sphi 0, %s26
    %s30 = sphi 0, %s29
    %s46 = sphi 0, %s30
    %s50 = sphi 0, %s50
    %s52 = sphi 0, %s50
    %s53 = sphi 0, %s52
    %s67 = sphi 0, %s53
    %s71 = sphi 0, %s71
    %s73 = sphi 0, %s71
    %s74 = sphi 0, %s73
    %s88 = sphi 0, %s74
    %s92 = sphi 0, %s92
    %s94 = sphi 0, %s92
    %s95 = sphi 0, %s94
    %s109 = sphi 0, %s95
    %s113 = sphi 0, %s113
    %s115 = sphi 0, %s113
    %s116 = sphi 0, %s115
    %s130 = sphi 0, %s116
    %s134 = sphi 0, %s134
    %s136 = sphi 0, %s134
    %s137 = sphi 0, %s136
    %s151 = sphi 0, %s137
    %s155 = sphi 0, %s155
    %s157 = sphi 0, %s155
    %s158 = sphi 0, %s157
    %s172 = sphi 0, %s158
    %s176 = sphi 0, %s176
    %s178 = sphi 0, %s176
    %s179 = sphi 0, %s178
    %s193 = sphi 0, %s179
    %s197 = sphi 0, %s197
    %s199 = sphi 0, %s197
    %s200 = sphi 0, %s199
    %s214 = sphi 0, %s200
    %s218 = sphi 0, %s218
    %s220 = sphi 0, %s218
    %s221 = sphi 0, %s220
    %s235 = sphi 0, %s221
    %s241 = sphi 0, %s243
    %s244 = sphi 0, %s241
    %s245 = sphi 0, %s244
    %s261 = sphi 0, %s245
  $region4: #{shufflenet_invres_forward.1} parent=0 // loop_header_branch
    %19 = sbr.rel (%p17) target = $region8
  $region5: #{shufflenet_invres_forward.1} parent=0 // loop_body
    %s21 = ssub.s32 %s16, 1
    %s22 = ssub.s32 %s16, 2
    %s23 = sadd.s32 %s16, 1
    %s24 = ssub.s32 %s16, %s23
    %p25 = scmp.eq.s32.totalorder %s24, 0
    %s27 = sadd.s32 %s26, 1
    %s28 = scalar_select %p25, %s26, %s27
    %p31 = pneg %p25
    %p32 = scmp.eq.s32.totalorder %s16, 1
    %p33 = por %p31, %p32
    %p34 = scmp.ne.s32.totalorder %s26, %s29
    %p35 = scmp.eq.s32.totalorder %s16, 0
    %p36 = por %p34, %p35
    %p37 = scmp.ne.s32.totalorder %s26, %s29
    %p38 = scmp.eq.s32.totalorder %s21, 1
    %p39 = por %p37, %p38
    %p40 = scmp.ne.s32.totalorder %s29, %s30
    %p41 = scmp.eq.s32.totalorder %s21, 0
    %p42 = por %p40, %p41
    %p43 = scmp.ne.s32.totalorder %s29, %s30
    %p44 = scmp.eq.s32.totalorder %s22, 1
    %p45 = por %p43, %p44
    %p47 = scmp.ne.s32.totalorder %s30, %s46
    %p48 = scmp.eq.s32.totalorder %s22, 0
    %p49 = por %p47, %p48
    %s51 = sadd.s32 %s50, 1
    %p54 = scmp.eq.s32.totalorder %s16, 1
    %p55 = scmp.ne.s32.totalorder %s50, %s52
    %p56 = scmp.eq.s32.totalorder %s16, 0
    %p57 = por %p55, %p56
    %p58 = scmp.ne.s32.totalorder %s50, %s52
    %p59 = scmp.eq.s32.totalorder %s21, 1
    %p60 = por %p58, %p59
    %p61 = scmp.ne.s32.totalorder %s52, %s53
    %p62 = scmp.eq.s32.totalorder %s21, 0
    %p63 = por %p61, %p62
    %p64 = scmp.ne.s32.totalorder %s52, %s53
    %p65 = scmp.eq.s32.totalorder %s22, 1
    %p66 = por %p64, %p65
    %p68 = scmp.ne.s32.totalorder %s53, %s67
    %p69 = scmp.eq.s32.totalorder %s22, 0
    %p70 = por %p68, %p69
    %s72 = sadd.s32 %s71, 1
    %p75 = scmp.eq.s32.totalorder %s16, 1
    %p76 = scmp.ne.s32.totalorder %s71, %s73
    %p77 = scmp.eq.s32.totalorder %s16, 0
    %p78 = por %p76, %p77
    %p79 = scmp.ne.s32.totalorder %s71, %s73
    %p80 = scmp.eq.s32.totalorder %s21, 1
    %p81 = por %p79, %p80
    %p82 = scmp.ne.s32.totalorder %s73, %s74
    %p83 = scmp.eq.s32.totalorder %s21, 0
    %p84 = por %p82, %p83
    %p85 = scmp.ne.s32.totalorder %s73, %s74
    %p86 = scmp.eq.s32.totalorder %s22, 1
    %p87 = por %p85, %p86
    %p89 = scmp.ne.s32.totalorder %s74, %s88
    %p90 = scmp.eq.s32.totalorder %s22, 0
    %p91 = por %p89, %p90
    %s93 = sadd.s32 %s92, 1
    %p96 = scmp.eq.s32.totalorder %s16, 1
    %p97 = scmp.ne.s32.totalorder %s92, %s94
    %p98 = scmp.eq.s32.totalorder %s16, 0
    %p99 = por %p97, %p98
    %p100 = scmp.ne.s32.totalorder %s92, %s94
    %p101 = scmp.eq.s32.totalorder %s21, 1
    %p102 = por %p100, %p101
    %p103 = scmp.ne.s32.totalorder %s94, %s95
    %p104 = scmp.eq.s32.totalorder %s21, 0
    %p105 = por %p103, %p104
    %p106 = scmp.ne.s32.totalorder %s94, %s95
    %p107 = scmp.eq.s32.totalorder %s22, 1
    %p108 = por %p106, %p107
    %p110 = scmp.ne.s32.totalorder %s95, %s109
    %p111 = scmp.eq.s32.totalorder %s22, 0
    %p112 = por %p110, %p111
    %s114 = sadd.s32 %s113, 1
    %p117 = scmp.eq.s32.totalorder %s16, 1
    %p118 = scmp.ne.s32.totalorder %s113, %s115
    %p119 = scmp.eq.s32.totalorder %s16, 0
    %p120 = por %p118, %p119
    %p121 = scmp.ne.s32.totalorder %s113, %s115
    %p122 = scmp.eq.s32.totalorder %s21, 1
    %p123 = por %p121, %p122
    %p124 = scmp.ne.s32.totalorder %s115, %s116
    %p125 = scmp.eq.s32.totalorder %s21, 0
    %p126 = por %p124, %p125
    %p127 = scmp.ne.s32.totalorder %s115, %s116
    %p128 = scmp.eq.s32.totalorder %s22, 1
    %p129 = por %p127, %p128
    %p131 = scmp.ne.s32.totalorder %s116, %s130
    %p132 = scmp.eq.s32.totalorder %s22, 0
    %p133 = por %p131, %p132
    %s135 = sadd.s32 %s134, 1
    %p138 = scmp.eq.s32.totalorder %s16, 1
    %p139 = scmp.ne.s32.totalorder %s134, %s136
    %p140 = scmp.eq.s32.totalorder %s16, 0
    %p141 = por %p139, %p140
    %p142 = scmp.ne.s32.totalorder %s134, %s136
    %p143 = scmp.eq.s32.totalorder %s21, 1
    %p144 = por %p142, %p143
    %p145 = scmp.ne.s32.totalorder %s136, %s137
    %p146 = scmp.eq.s32.totalorder %s21, 0
    %p147 = por %p145, %p146
    %p148 = scmp.ne.s32.totalorder %s136, %s137
    %p149 = scmp.eq.s32.totalorder %s22, 1
    %p150 = por %p148, %p149
    %p152 = scmp.ne.s32.totalorder %s137, %s151
    %p153 = scmp.eq.s32.totalorder %s22, 0
    %p154 = por %p152, %p153
    %s156 = sadd.s32 %s155, 1
    %p159 = scmp.eq.s32.totalorder %s16, 1
    %p160 = scmp.ne.s32.totalorder %s155, %s157
    %p161 = scmp.eq.s32.totalorder %s16, 0
    %p162 = por %p160, %p161
    %p163 = scmp.ne.s32.totalorder %s155, %s157
    %p164 = scmp.eq.s32.totalorder %s21, 1
    %p165 = por %p163, %p164
    %p166 = scmp.ne.s32.totalorder %s157, %s158
    %p167 = scmp.eq.s32.totalorder %s21, 0
    %p168 = por %p166, %p167
    %p169 = scmp.ne.s32.totalorder %s157, %s158
    %p170 = scmp.eq.s32.totalorder %s22, 1
    %p171 = por %p169, %p170
    %p173 = scmp.ne.s32.totalorder %s158, %s172
    %p174 = scmp.eq.s32.totalorder %s22, 0
    %p175 = por %p173, %p174
    %s177 = sadd.s32 %s176, 1
    %p180 = scmp.eq.s32.totalorder %s16, 1
    %p181 = scmp.ne.s32.totalorder %s176, %s178
    %p182 = scmp.eq.s32.totalorder %s16, 0
    %p183 = por %p181, %p182
    %p184 = scmp.ne.s32.totalorder %s176, %s178
    %p185 = scmp.eq.s32.totalorder %s21, 1
    %p186 = por %p184, %p185
    %p187 = scmp.ne.s32.totalorder %s178, %s179
    %p188 = scmp.eq.s32.totalorder %s21, 0
    %p189 = por %p187, %p188
    %p190 = scmp.ne.s32.totalorder %s178, %s179
    %p191 = scmp.eq.s32.totalorder %s22, 1
    %p192 = por %p190, %p191
    %p194 = scmp.ne.s32.totalorder %s179, %s193
    %p195 = scmp.eq.s32.totalorder %s22, 0
    %p196 = por %p194, %p195
    %s198 = sadd.s32 %s197, 1
    %p201 = scmp.eq.s32.totalorder %s16, 1
    %p202 = scmp.ne.s32.totalorder %s197, %s199
    %p203 = scmp.eq.s32.totalorder %s16, 0
    %p204 = por %p202, %p203
    %p205 = scmp.ne.s32.totalorder %s197, %s199
    %p206 = scmp.eq.s32.totalorder %s21, 1
    %p207 = por %p205, %p206
    %p208 = scmp.ne.s32.totalorder %s199, %s200
    %p209 = scmp.eq.s32.totalorder %s21, 0
    %p210 = por %p208, %p209
    %p211 = scmp.ne.s32.totalorder %s199, %s200
    %p212 = scmp.eq.s32.totalorder %s22, 1
    %p213 = por %p211, %p212
    %p215 = scmp.ne.s32.totalorder %s200, %s214
    %p216 = scmp.eq.s32.totalorder %s22, 0
    %p217 = por %p215, %p216
    %s219 = sadd.s32 %s218, 1
    %p222 = scmp.eq.s32.totalorder %s16, 1
    %p223 = scmp.ne.s32.totalorder %s218, %s220
    %p224 = scmp.eq.s32.totalorder %s16, 0
    %p225 = por %p223, %p224
    %p226 = scmp.ne.s32.totalorder %s218, %s220
    %p227 = scmp.eq.s32.totalorder %s21, 1
    %p228 = por %p226, %p227
    %p229 = scmp.ne.s32.totalorder %s220, %s221
    %p230 = scmp.eq.s32.totalorder %s21, 0
    %p231 = por %p229, %p230
    %p232 = scmp.ne.s32.totalorder %s220, %s221
    %p233 = scmp.eq.s32.totalorder %s22, 1
    %p234 = por %p232, %p233
    %p236 = scmp.ne.s32.totalorder %s221, %s235
    %p237 = scmp.eq.s32.totalorder %s22, 0
    %p238 = por %p236, %p237
    %s239 = ssub.s32 %s16, %s23
    %p240 = scmp.eq.s32.totalorder %s239, 0
    %s242 = sadd.s32 %s241, 1
    %s243 = scalar_select %p240, %s241, %s242
    %p246 = pneg %p240
    %p247 = scmp.eq.s32.totalorder %s16, 1
    %p248 = por %p246, %p247
    %p249 = scmp.ne.s32.totalorder %s241, %s244
    %p250 = scmp.eq.s32.totalorder %s16, 0
    %p251 = por %p249, %p250
    %p252 = scmp.ne.s32.totalorder %s241, %s244
    %p253 = scmp.eq.s32.totalorder %s21, 1
    %p254 = por %p252, %p253
    %p255 = scmp.ne.s32.totalorder %s244, %s245
    %p256 = scmp.eq.s32.totalorder %s21, 0
    %p257 = por %p255, %p256
    %p258 = scmp.ne.s32.totalorder %s244, %s245
    %p259 = scmp.eq.s32.totalorder %s22, 1
    %p260 = por %p258, %p259
    %p262 = scmp.ne.s32.totalorder %s245, %s261
    %p263 = scmp.eq.s32.totalorder %s22, 0
    %p264 = por %p262, %p263
    %p265 = scmp.le.s32.totalorder 1, %s16
    %p266 = scmp.lt.s32.totalorder %s16, 3
    %p267 = pnand %p265, %p266
    %p268 = pneg %p267
    // Predicated region
    $region9: #{shufflenet_invres_forward.1} parent=5 // pred_check
      _
    $region10: #{shufflenet_invres_forward.1} parent=5 // pred_check_branch
      %270 = sbr.rel (%p267) target = $region12
    $region11: #{shufflenet_invres_forward.1} parent=5 // pred_region
      %s271 = ssub.s32 %s16, 1
      // Predicated region
      $region13: #{shufflenet_invres_forward.1} parent=11 // pred_check
        %p272 = pneg %p63
      $region14: #{shufflenet_invres_forward.1} parent=11 // pred_check_branch
        %274 = sbr.rel (%p272) target = $region16
      $region15: #{shufflenet_invres_forward.1} parent=11 // pred_region
        _
      $region16: #{shufflenet_invres_forward.1} parent=11 // pred_fallthru
        _
      // Predicated region
      $region17: #{shufflenet_invres_forward.1} parent=11 // pred_check
        %p275 = pneg %p84
      $region18: #{shufflenet_invres_forward.1} parent=11 // pred_check_branch
        %277 = sbr.rel (%p275) target = $region20
      $region19: #{shufflenet_invres_forward.1} parent=11 // pred_region
        _
      $region20: #{shufflenet_invres_forward.1} parent=11 // pred_fallthru
        _
      // Predicated region
      $region21: #{shufflenet_invres_forward.1} parent=11 // pred_check
        %p278 = pneg %p105
      $region22: #{shufflenet_invres_forward.1} parent=11 // pred_check_branch
        %280 = sbr.rel (%p278) target = $region24
      $region23: #{shufflenet_invres_forward.1} parent=11 // pred_region
        _
      $region24: #{shufflenet_invres_forward.1} parent=11 // pred_fallthru
        _
      // Predicated region
      $region25: #{shufflenet_invres_forward.1} parent=11 // pred_check
        %p281 = pneg %p126
      $region26: #{shufflenet_invres_forward.1} parent=11 // pred_check_branch
        %283 = sbr.rel (%p281) target = $region28
      $region27: #{shufflenet_invres_forward.1} parent=11 // pred_region
        _
      $region28: #{shufflenet_invres_forward.1} parent=11 // pred_fallthru
        _
      // Predicated region
      $region29: #{shufflenet_invres_forward.1} parent=11 // pred_check
        %p284 = pneg %p147
      $region30: #{shufflenet_invres_forward.1} parent=11 // pred_check_branch
        %286 = sbr.rel (%p284) target = $region32
      $region31: #{shufflenet_invres_forward.1} parent=11 // pred_region
        _
      $region32: #{shufflenet_invres_forward.1} parent=11 // pred_fallthru
        _
      // Predicated region
      $region33: #{shufflenet_invres_forward.1} parent=11 // pred_check
        %p287 = pneg %p168
      $region34: #{shufflenet_invres_forward.1} parent=11 // pred_check_branch
        %289 = sbr.rel (%p287) target = $region36
      $region35: #{shufflenet_invres_forward.1} parent=11 // pred_region
        _
      $region36: #{shufflenet_invres_forward.1} parent=11 // pred_fallthru
        _
      // Predicated region
      $region37: #{shufflenet_invres_forward.1} parent=11 // pred_check
        %p290 = pneg %p189
      $region38: #{shufflenet_invres_forward.1} parent=11 // pred_check_branch
        %292 = sbr.rel (%p290) target = $region40
      $region39: #{shufflenet_invres_forward.1} parent=11 // pred_region
        _
      $region40: #{shufflenet_invres_forward.1} parent=11 // pred_fallthru
        _
      // Predicated region
      $region41: #{shufflenet_invres_forward.1} parent=11 // pred_check
        %p293 = pneg %p210
      $region42: #{shufflenet_invres_forward.1} parent=11 // pred_check_branch
        %295 = sbr.rel (%p293) target = $region44
      $region43: #{shufflenet_invres_forward.1} parent=11 // pred_region
        _
      $region44: #{shufflenet_invres_forward.1} parent=11 // pred_fallthru
        _
      // Predicated region
      $region45: #{shufflenet_invres_forward.1} parent=11 // pred_check
        %p296 = pneg %p231
      $region46: #{shufflenet_invres_forward.1} parent=11 // pred_check_branch
        %298 = sbr.rel (%p296) target = $region48
      $region47: #{shufflenet_invres_forward.1} parent=11 // pred_region
        _
      $region48: #{shufflenet_invres_forward.1} parent=11 // pred_fallthru
        _
    $region12: #{shufflenet_invres_forward.1} parent=5 // pred_fallthru
      _
    %p299 = scmp.lt.s32.totalorder %s16, 2
    // Predicated region
    $region49: #{shufflenet_invres_forward.1} parent=5 // pred_check
      %p300 = pneg %p299
    $region50: #{shufflenet_invres_forward.1} parent=5 // pred_check_branch
      %302 = sbr.rel (%p300) target = $region52
    $region51: #{shufflenet_invres_forward.1} parent=5 // pred_region
      // Predicated region
      $region53: #{shufflenet_invres_forward.1} parent=51 // pred_check
        %p303 = pneg %p36
      $region54: #{shufflenet_invres_forward.1} parent=51 // pred_check_branch
        %305 = sbr.rel (%p303) target = $region56
      $region55: #{shufflenet_invres_forward.1} parent=51 // pred_region
        %p306 = scmp.lt.s32.totalorder %s16, 1
        %s307 = scalar_select %p306, %s16, 1
        %s308 = smul.addr %s307, 32
        %s309 = smul.addr %s308, 8
        %s310 = scalar_lea.vmem %s0, %s309
      $region56: #{shufflenet_invres_forward.1} parent=51 // pred_fallthru
        _
    $region52: #{shufflenet_invres_forward.1} parent=5 // pred_fallthru
      _
    %p311 = scmp.le.s32.totalorder 1, %s16
    %p312 = scmp.lt.s32.totalorder %s16, 3
    %p313 = pnand %p311, %p312
    %p314 = pneg %p313
    // Predicated region
    $region57: #{shufflenet_invres_forward.1} parent=5 // pred_check
      _
    $region58: #{shufflenet_invres_forward.1} parent=5 // pred_check_branch
      %316 = sbr.rel (%p313) target = $region60
    $region59: #{shufflenet_invres_forward.1} parent=5 // pred_region
      %s317 = ssub.s32 %s16, 1
      %p318 = scmp.lt.s32.totalorder %s21, 1
      %s319 = scalar_select %p318, %s21, 1
      %s320 = smul.addr %s319, 32
      %s321 = smul.addr %s320, 8
      %s322 = scalar_lea.vmem %s0, %s321
      %p323 = pneg %p42
      %p324 = pneg %p39
      %p325 = pneg %p63
      %p326 = pneg %p60
      %p327 = pneg %p84
      %p328 = pneg %p81
      %p329 = pneg %p105
      %p330 = pneg %p102
      %p331 = pneg %p126
      %p332 = pneg %p123
      %p333 = pneg %p147
      %p334 = pneg %p144
      %p335 = pneg %p168
      %p336 = pneg %p165
      %p337 = pneg %p189
      %p338 = pneg %p186
      %p339 = pneg %p210
      %p340 = pneg %p207
      %p341 = pneg %p231
      %p342 = pneg %p228
      %p343 = pneg %p257
      %p344 = pneg %p254
      %p345 = scmp.lt.s32.totalorder %s21, 1
      %s346 = scalar_select %p345, %s21, 1
      %s347 = smul.addr %s346, 32
      %s348 = smul.addr %s347, 8
      %s349 = scalar_lea.vmem %s10, %s348
      %p350 = scmp.lt.s32.totalorder %s21, 1
      %s351 = scalar_select %p350, %s21, 1
      %s352 = smul.addr %s351, 32
      %s353 = smul.addr %s352, 8
      %s354 = scalar_lea.vmem %s0, %s353
      %p355 = scmp.lt.s32.totalorder %s21, 1
      %s356 = scalar_select %p355, %s21, 1
      %s357 = smul.addr %s356, 32
      %s358 = smul.addr %s357, 8
      %s359 = scalar_lea.vmem %s10, %s358
      %v360 = vld [vmem:[%s354] sm:$0xff]
      %v361 = vld [vmem:[%s354 + $0x8] sm:$0xff]
      %v362 = vld [vmem:[%s354 + $0x10] sm:$0xff]
      %v363 = vld [vmem:[%s354 + $0x18] sm:$0xff]
      %v364 = vld [vmem:[%s354 + $0x20] sm:$0xff]
      %v365 = vld [vmem:[%s354 + $0x28] sm:$0xff]
      %v366 = vld [vmem:[%s354 + $0x30] sm:$0xff]
      %v367 = vld [vmem:[%s354 + $0x38] sm:$0xff]
      %v368 = vld [vmem:[%s354 + $0x40] sm:$0xff]
      %v369 = vld [vmem:[%s354 + $0x48] sm:$0xff]
      %v370 = vld [vmem:[%s354 + $0x50] sm:$0xff]
      %v371 = vld [vmem:[%s354 + $0x58] sm:$0xff]
      %v372 = vld [vmem:[%s354 + $0x60] sm:$0xff]
      %v373 = vld [vmem:[%s354 + $0x68] sm:$0xff]
      %v374 = vld [vmem:[%s354 + $0x70] sm:$0xff]
      %v375 = vld [vmem:[%s354 + $0x78] sm:$0xff]
      %v376 = vld [vmem:[%s354 + $0x80] sm:$0xff]
      %v377 = vld [vmem:[%s354 + $0x88] sm:$0xff]
      %v378 = vld [vmem:[%s354 + $0x90] sm:$0xff]
      %v379 = vld [vmem:[%s354 + $0x98] sm:$0xff]
      %v380 = vld [vmem:[%s354 + $0xa0] sm:$0xff]
      %v381 = vld [vmem:[%s354 + $0xa8] sm:$0xff]
      %v382 = vld [vmem:[%s354 + $0xb0] sm:$0xff]
      %v383 = vld [vmem:[%s354 + $0xb8] sm:$0xff]
      %v384 = vld [vmem:[%s354 + $0xc0] sm:$0xff]
      %v385 = vld [vmem:[%s354 + $0xc8] sm:$0xff]
      %v386 = vld [vmem:[%s354 + $0xd0] sm:$0xff]
      %v387 = vld [vmem:[%s354 + $0xd8] sm:$0xff]
      %v388 = vld [vmem:[%s354 + $0xe0] sm:$0xff]
      %v389 = vld [vmem:[%s354 + $0xe8] sm:$0xff]
      %v390 = vld [vmem:[%s354 + $0xf0] sm:$0xff]
      %v391 = vld [vmem:[%s354 + $0xf8] sm:$0xff]
      %v392 = vld [vmem:[%s1] sm:$0xff]
      %v393 = vld [vmem:[%s1 + $0x8] sm:$0xff]
      %v394 = vld [vmem:[%s1 + $0x10] sm:$0xff]
      %v395 = vld [vmem:[%s1 + $0x18] sm:$0xff]
      %v396 = vld [vmem:[%s1 + $0x20] sm:$0xff]
      %v397 = vld [vmem:[%s1 + $0x28] sm:$0xff]
      %v398 = vld [vmem:[%s1 + $0x30] sm:$0xff]
      %v399 = vld [vmem:[%s1 + $0x38] sm:$0xff]
      %v400 = vld [vmem:[%s1 + $0x40] sm:$0xff]
      %v401 = vld [vmem:[%s1 + $0x48] sm:$0xff]
      %v402 = vld [vmem:[%s1 + $0x50] sm:$0xff]
      %v403 = vld [vmem:[%s1 + $0x58] sm:$0xff]
      %v404 = vld [vmem:[%s1 + $0x60] sm:$0xff]
      %v405 = vld [vmem:[%s1 + $0x68] sm:$0xff]
      %v406 = vld [vmem:[%s1 + $0x70] sm:$0xff]
      %v407 = vld [vmem:[%s1 + $0x78] sm:$0xff]
      %408 = vmatpush.msra.mxu0 %v407
      %409 = vmatpush.msra.mxu0 %v406
      %410 = vmatpush.msra.mxu0 %v405
      %411 = vmatpush.msra.mxu0 %v404
      %412 = vmatpush.msra.mxu0 %v403
      %413 = vmatpush.msra.mxu0 %v402
      %414 = vmatpush.msra.mxu0 %v401
      %415 = vmatpush.msra.mxu0 %v400
      %416 = vmatpush.msra.mxu0 %v399
      %417 = vmatpush.msra.mxu0 %v398
      %418 = vmatpush.msra.mxu0 %v397
      %419 = vmatpush.msra.mxu0 %v396
      %420 = vmatpush.msra.mxu0 %v395
      %421 = vmatpush.msra.mxu0 %v394
      %422 = vmatpush.msra.mxu0 %v393
      %423 = vmatpush.msra.mxu0 %v392
      %424 = vmatmul.f32.gmra.mxu0 %v360
      %v425 = vpop.f32.mrf.mxu0
      %v426 = vadd.f32 0.0, %v425
      %427 = vmatmul.f32.gmra.mxu0 %v361
      %v428 = vpop.f32.mrf.mxu0
      %v429 = vadd.f32 0.0, %v428
      %430 = vmatmul.f32.gmra.mxu0 %v362
      %v431 = vpop.f32.mrf.mxu0
      %v432 = vadd.f32 0.0, %v431
      %433 = vmatmul.f32.gmra.mxu0 %v363
      %v434 = vpop.f32.mrf.mxu0
      %v435 = vadd.f32 0.0, %v434
      %436 = vmatmul.f32.gmra.mxu0 %v364
      %v437 = vpop.f32.mrf.mxu0
      %v438 = vadd.f32 0.0, %v437
      %439 = vmatmul.f32.gmra.mxu0 %v365
      %v440 = vpop.f32.mrf.mxu0
      %v441 = vadd.f32 0.0, %v440
      %442 = vmatmul.f32.gmra.mxu0 %v366
      %v443 = vpop.f32.mrf.mxu0
      %v444 = vadd.f32 0.0, %v443
      %445 = vmatmul.f32.gmra.mxu0 %v367
      %v446 = vpop.f32.mrf.mxu0
      %v447 = vadd.f32 0.0, %v446
      %448 = vmatmul.f32.gmra.mxu0 %v368
      %v449 = vpop.f32.mrf.mxu0
      %v450 = vadd.f32 0.0, %v449
      %451 = vmatmul.f32.gmra.mxu0 %v369
      %v452 = vpop.f32.mrf.mxu0
      %v453 = vadd.f32 0.0, %v452
      %454 = vmatmul.f32.gmra.mxu0 %v370
      %v455 = vpop.f32.mrf.mxu0
      %v456 = vadd.f32 0.0, %v455
      %457 = vmatmul.f32.gmra.mxu0 %v371
      %v458 = vpop.f32.mrf.mxu0
      %v459 = vadd.f32 0.0, %v458
      %460 = vmatmul.f32.gmra.mxu0 %v372
      %v461 = vpop.f32.mrf.mxu0
      %v462 = vadd.f32 0.0, %v461
      %463 = vmatmul.f32.gmra.mxu0 %v373
      %v464 = vpop.f32.mrf.mxu0
      %v465 = vadd.f32 0.0, %v464
      %466 = vmatmul.f32.gmra.mxu0 %v374
      %v467 = vpop.f32.mrf.mxu0
      %v468 = vadd.f32 0.0, %v467
      %469 = vmatmul.f32.gmra.mxu0 %v375
      %v470 = vpop.f32.mrf.mxu0
      %v471 = vadd.f32 0.0, %v470
      %472 = vmatmul.f32.gmra.mxu0 %v376
      %v473 = vpop.f32.mrf.mxu0
      %v474 = vadd.f32 0.0, %v473
      %475 = vmatmul.f32.gmra.mxu0 %v377
      %v476 = vpop.f32.mrf.mxu0
      %v477 = vadd.f32 0.0, %v476
      %478 = vmatmul.f32.gmra.mxu0 %v378
      %v479 = vpop.f32.mrf.mxu0
      %v480 = vadd.f32 0.0, %v479
      %481 = vmatmul.f32.gmra.mxu0 %v379
      %v482 = vpop.f32.mrf.mxu0
      %v483 = vadd.f32 0.0, %v482
      %484 = vmatmul.f32.gmra.mxu0 %v380
      %v485 = vpop.f32.mrf.mxu0
      %v486 = vadd.f32 0.0, %v485
      %487 = vmatmul.f32.gmra.mxu0 %v381
      %v488 = vpop.f32.mrf.mxu0
      %v489 = vadd.f32 0.0, %v488
      %490 = vmatmul.f32.gmra.mxu0 %v382
      %v491 = vpop.f32.mrf.mxu0
      %v492 = vadd.f32 0.0, %v491
      %493 = vmatmul.f32.gmra.mxu0 %v383
      %v494 = vpop.f32.mrf.mxu0
      %v495 = vadd.f32 0.0, %v494
      %496 = vmatmul.f32.gmra.mxu0 %v384
      %v497 = vpop.f32.mrf.mxu0
      %v498 = vadd.f32 0.0, %v497
      %499 = vmatmul.f32.gmra.mxu0 %v385
      %v500 = vpop.f32.mrf.mxu0
      %v501 = vadd.f32 0.0, %v500
      %502 = vmatmul.f32.gmra.mxu0 %v386
      %v503 = vpop.f32.mrf.mxu0
      %v504 = vadd.f32 0.0, %v503
      %505 = vmatmul.f32.gmra.mxu0 %v387
      %v506 = vpop.f32.mrf.mxu0
      %v507 = vadd.f32 0.0, %v506
      %508 = vmatmul.f32.gmra.mxu0 %v388
      %v509 = vpop.f32.mrf.mxu0
      %v510 = vadd.f32 0.0, %v509
      %511 = vmatmul.f32.gmra.mxu0 %v389
      %v512 = vpop.f32.mrf.mxu0
      %v513 = vadd.f32 0.0, %v512
      %514 = vmatmul.f32.gmra.mxu0 %v390
      %v515 = vpop.f32.mrf.mxu0
      %v516 = vadd.f32 0.0, %v515
      %517 = vmatmul.f32.gmra.mxu0 %v391
      %v518 = vpop.f32.mrf.mxu0
      %v519 = vadd.f32 0.0, %v518
      %520 = vdwg.mxu0
      %v521 = vld [vmem:[%s2] sm:$0x1]
      %v523 = vperm.slane %v521, 0
      %v525 = vmul.f32 %v426, %v523
      %v526 = vmul.f32 %v429, %v523
      %v527 = vmul.f32 %v432, %v523
      %v528 = vmul.f32 %v435, %v523
      %v529 = vmul.f32 %v438, %v523
      %v530 = vmul.f32 %v441, %v523
      %v531 = vmul.f32 %v444, %v523
      %v532 = vmul.f32 %v447, %v523
      %v533 = vmul.f32 %v450, %v523
      %v534 = vmul.f32 %v453, %v523
      %v535 = vmul.f32 %v456, %v523
      %v536 = vmul.f32 %v459, %v523
      %v537 = vmul.f32 %v462, %v523
      %v538 = vmul.f32 %v465, %v523
      %v539 = vmul.f32 %v468, %v523
      %v540 = vmul.f32 %v471, %v523
      %v541 = vmul.f32 %v474, %v523
      %v542 = vmul.f32 %v477, %v523
      %v543 = vmul.f32 %v480, %v523
      %v544 = vmul.f32 %v483, %v523
      %v545 = vmul.f32 %v486, %v523
      %v546 = vmul.f32 %v489, %v523
      %v547 = vmul.f32 %v492, %v523
      %v548 = vmul.f32 %v495, %v523
      %v549 = vmul.f32 %v498, %v523
      %v550 = vmul.f32 %v501, %v523
      %v551 = vmul.f32 %v504, %v523
      %v552 = vmul.f32 %v507, %v523
      %v553 = vmul.f32 %v510, %v523
      %v554 = vmul.f32 %v513, %v523
      %v555 = vmul.f32 %v516, %v523
      %v556 = vmul.f32 %v519, %v523
      %v557 = vld [vmem:[%s3] sm:$0x1]
      %v559 = vperm.slane %v557, 0
      %v561 = vadd.f32 %v525, %v559
      %v562 = vadd.f32 %v526, %v559
      %v563 = vadd.f32 %v527, %v559
      %v564 = vadd.f32 %v528, %v559
      %v565 = vadd.f32 %v529, %v559
      %v566 = vadd.f32 %v530, %v559
      %v567 = vadd.f32 %v531, %v559
      %v568 = vadd.f32 %v532, %v559
      %v569 = vadd.f32 %v533, %v559
      %v570 = vadd.f32 %v534, %v559
      %v571 = vadd.f32 %v535, %v559
      %v572 = vadd.f32 %v536, %v559
      %v573 = vadd.f32 %v537, %v559
      %v574 = vadd.f32 %v538, %v559
      %v575 = vadd.f32 %v539, %v559
      %v576 = vadd.f32 %v540, %v559
      %v577 = vadd.f32 %v541, %v559
      %v578 = vadd.f32 %v542, %v559
      %v579 = vadd.f32 %v543, %v559
      %v580 = vadd.f32 %v544, %v559
      %v581 = vadd.f32 %v545, %v559
      %v582 = vadd.f32 %v546, %v559
      %v583 = vadd.f32 %v547, %v559
      %v584 = vadd.f32 %v548, %v559
      %v585 = vadd.f32 %v549, %v559
      %v586 = vadd.f32 %v550, %v559
      %v587 = vadd.f32 %v551, %v559
      %v588 = vadd.f32 %v552, %v559
      %v589 = vadd.f32 %v553, %v559
      %v590 = vadd.f32 %v554, %v559
      %v591 = vadd.f32 %v555, %v559
      %v592 = vadd.f32 %v556, %v559
      %v593 = vmax.f32 %v561, 0.0
      %v594 = vmax.f32 %v562, 0.0
      %v595 = vmax.f32 %v563, 0.0
      %v596 = vmax.f32 %v564, 0.0
      %v597 = vmax.f32 %v565, 0.0
      %v598 = vmax.f32 %v566, 0.0
      %v599 = vmax.f32 %v567, 0.0
      %v600 = vmax.f32 %v568, 0.0
      %v601 = vmax.f32 %v569, 0.0
      %v602 = vmax.f32 %v570, 0.0
      %v603 = vmax.f32 %v571, 0.0
      %v604 = vmax.f32 %v572, 0.0
      %v605 = vmax.f32 %v573, 0.0
      %v606 = vmax.f32 %v574, 0.0
      %v607 = vmax.f32 %v575, 0.0
      %v608 = vmax.f32 %v576, 0.0
      %v609 = vmax.f32 %v577, 0.0
      %v610 = vmax.f32 %v578, 0.0
      %v611 = vmax.f32 %v579, 0.0
      %v612 = vmax.f32 %v580, 0.0
      %v613 = vmax.f32 %v581, 0.0
      %v614 = vmax.f32 %v582, 0.0
      %v615 = vmax.f32 %v583, 0.0
      %v616 = vmax.f32 %v584, 0.0
      %v617 = vmax.f32 %v585, 0.0
      %v618 = vmax.f32 %v586, 0.0
      %v619 = vmax.f32 %v587, 0.0
      %v620 = vmax.f32 %v588, 0.0
      %v621 = vmax.f32 %v589, 0.0
      %v622 = vmax.f32 %v590, 0.0
      %v623 = vmax.f32 %v591, 0.0
      %v624 = vmax.f32 %v592, 0.0
      %625 = vst [vmem:[#allocation2] sm:$0xff] 0.0
      %626 = vst [vmem:[#allocation2 + $0x8] sm:$0xff] 0.0
      %627 = vst [vmem:[#allocation2 + $0x10] sm:$0x3] 0.0
      %628 = vst [vmem:[#allocation2 + $0x18] sm:$0xff] 0.0
      %629 = vst [vmem:[#allocation2 + $0x20] sm:$0xff] 0.0
      %630 = vst [vmem:[#allocation2 + $0x28] sm:$0x3] 0.0
      %631 = vst [vmem:[#allocation2 + $0x30] sm:$0xff] 0.0
      %632 = vst [vmem:[#allocation2 + $0x38] sm:$0xff] 0.0
      %633 = vst [vmem:[#allocation2 + $0x40] sm:$0x3] 0.0
      %634 = vst [vmem:[#allocation2 + $0x48] sm:$0xff] 0.0
      %635 = vst [vmem:[#allocation2 + $0x50] sm:$0xff] 0.0
      %636 = vst [vmem:[#allocation2 + $0x58] sm:$0x3] 0.0
      %637 = vst [vmem:[#allocation2 + $0x60] sm:$0xff] 0.0
      %638 = vst [vmem:[#allocation2 + $0x68] sm:$0xff] 0.0
      %639 = vst [vmem:[#allocation2 + $0x70] sm:$0x3] 0.0
      %640 = vst [vmem:[#allocation2 + $0x78] sm:$0xff] 0.0
      %641 = vst [vmem:[#allocation2 + $0x80] sm:$0xff] 0.0
      %642 = vst [vmem:[#allocation2 + $0x88] sm:$0x3] 0.0
      %643 = vst [vmem:[#allocation2 + $0x90] sm:$0xff] 0.0
      %644 = vst [vmem:[#allocation2 + $0x98] sm:$0xff] 0.0
      %645 = vst [vmem:[#allocation2 + $0xa0] sm:$0x3] 0.0
      %646 = vst [vmem:[#allocation2 + $0xa8] sm:$0xff] 0.0
      %647 = vst [vmem:[#allocation2 + $0xb0] sm:$0xff] 0.0
      %648 = vst [vmem:[#allocation2 + $0xb8] sm:$0x3] 0.0
      %649 = vst [vmem:[#allocation2 + $0xc0] sm:$0xff] 0.0
      %650 = vst [vmem:[#allocation2 + $0xc8] sm:$0xff] 0.0
      %651 = vst [vmem:[#allocation2 + $0xd0] sm:$0x3] 0.0
      %652 = vst [vmem:[#allocation2 + $0xd8] sm:$0xff] 0.0
      %653 = vst [vmem:[#allocation2 + $0xe0] sm:$0xff] 0.0
      %654 = vst [vmem:[#allocation2 + $0xe8] sm:$0x3] 0.0
      %655 = vst [vmem:[#allocation2 + $0xf0] sm:$0xff] 0.0
      %656 = vst [vmem:[#allocation2 + $0xf8] sm:$0xff] 0.0
      %657 = vst [vmem:[#allocation2 + $0x100] sm:$0x3] 0.0
      %658 = vst [vmem:[#allocation2 + $0x108] sm:$0xff] 0.0
      %659 = vst [vmem:[#allocation2 + $0x110] sm:$0xff] 0.0
      %660 = vst [vmem:[#allocation2 + $0x118] sm:$0x3] 0.0
      %661 = vst [vmem:[#allocation2 + $0x120] sm:$0xff] 0.0
      %662 = vst [vmem:[#allocation2 + $0x128] sm:$0xff] 0.0
      %663 = vst [vmem:[#allocation2 + $0x130] sm:$0x3] 0.0
      %664 = vst [vmem:[#allocation2 + $0x138] sm:$0xff] 0.0
      %665 = vst [vmem:[#allocation2 + $0x140] sm:$0xff] 0.0
      %666 = vst [vmem:[#allocation2 + $0x148] sm:$0x3] 0.0
      %667 = vst [vmem:[#allocation2 + $0x150] sm:$0xff] 0.0
      %668 = vst [vmem:[#allocation2 + $0x158] sm:$0xff] 0.0
      %669 = vst [vmem:[#allocation2 + $0x160] sm:$0x3] 0.0
      %670 = vst [vmem:[#allocation2 + $0x168] sm:$0xff] 0.0
      %671 = vst [vmem:[#allocation2 + $0x170] sm:$0xff] 0.0
      %672 = vst [vmem:[#allocation2 + $0x178] sm:$0x3] 0.0
      %673 = vst [vmem:[#allocation2 + $0x180] sm:$0xff] 0.0
      %674 = vst [vmem:[#allocation2 + $0x188] sm:$0xff] 0.0
      %675 = vst [vmem:[#allocation2 + $0x190] sm:$0x3] 0.0
      %676 = vst [vmem:[#allocation2 + $0x198] sm:$0xff] 0.0
      %677 = vst [vmem:[#allocation2 + $0x1a0] sm:$0xff] 0.0
      %678 = vst [vmem:[#allocation2 + $0x1a8] sm:$0x3] 0.0
      %s679 = scalar_lea.vmem [#allocation2], 24
      %680 = vst [vmem:[%s679 + $0x1] sm:$0xff] %v593
      %681 = vst [vmem:[%s679 + $0x9] sm:$0xff] %v594
      %682 = vst [vmem:[%s679 + $0x19] sm:$0xff] %v595
      %683 = vst [vmem:[%s679 + $0x21] sm:$0xff] %v596
      %684 = vst [vmem:[%s679 + $0x31] sm:$0xff] %v597
      %685 = vst [vmem:[%s679 + $0x39] sm:$0xff] %v598
      %686 = vst [vmem:[%s679 + $0x49] sm:$0xff] %v599
      %687 = vst [vmem:[%s679 + $0x51] sm:$0xff] %v600
      %688 = vst [vmem:[%s679 + $0x61] sm:$0xff] %v601
      %689 = vst [vmem:[%s679 + $0x69] sm:$0xff] %v602
      %690 = vst [vmem:[%s679 + $0x79] sm:$0xff] %v603
      %691 = vst [vmem:[%s679 + $0x81] sm:$0xff] %v604
      %692 = vst [vmem:[%s679 + $0x91] sm:$0xff] %v605
      %693 = vst [vmem:[%s679 + $0x99] sm:$0xff] %v606
      %694 = vst [vmem:[%s679 + $0xa9] sm:$0xff] %v607
      %695 = vst [vmem:[%s679 + $0xb1] sm:$0xff] %v608
      %696 = vst [vmem:[%s679 + $0xc1] sm:$0xff] %v609
      %697 = vst [vmem:[%s679 + $0xc9] sm:$0xff] %v610
      %698 = vst [vmem:[%s679 + $0xd9] sm:$0xff] %v611
      %699 = vst [vmem:[%s679 + $0xe1] sm:$0xff] %v612
      %700 = vst [vmem:[%s679 + $0xf1] sm:$0xff] %v613
      %701 = vst [vmem:[%s679 + $0xf9] sm:$0xff] %v614
      %702 = vst [vmem:[%s679 + $0x109] sm:$0xff] %v615
      %703 = vst [vmem:[%s679 + $0x111] sm:$0xff] %v616
      %704 = vst [vmem:[%s679 + $0x121] sm:$0xff] %v617
      %705 = vst [vmem:[%s679 + $0x129] sm:$0xff] %v618
      %706 = vst [vmem:[%s679 + $0x139] sm:$0xff] %v619
      %707 = vst [vmem:[%s679 + $0x141] sm:$0xff] %v620
      %708 = vst [vmem:[%s679 + $0x151] sm:$0xff] %v621
      %709 = vst [vmem:[%s679 + $0x159] sm:$0xff] %v622
      %710 = vst [vmem:[%s679 + $0x169] sm:$0xff] %v623
      %711 = vst [vmem:[%s679 + $0x171] sm:$0xff] %v624
      %v712 = vld [vmem:[#allocation2] sm:$0xff]
      %v713 = vld [vmem:[#allocation2 + $0x8] sm:$0xff]
      %v714 = vld [vmem:[#allocation2 + $0x18] sm:$0xff]
      %v715 = vld [vmem:[#allocation2 + $0x20] sm:$0xff]
      %v716 = vld [vmem:[#allocation2 + $0x30] sm:$0xff]
      %v717 = vld [vmem:[#allocation2 + $0x38] sm:$0xff]
      %v718 = vld [vmem:[#allocation2 + $0x48] sm:$0xff]
      %v719 = vld [vmem:[#allocation2 + $0x50] sm:$0xff]
      %v720 = vld [vmem:[#allocation2 + $0x60] sm:$0xff]
      %v721 = vld [vmem:[#allocation2 + $0x68] sm:$0xff]
      %v722 = vld [vmem:[#allocation2 + $0x78] sm:$0xff]
      %v723 = vld [vmem:[#allocation2 + $0x80] sm:$0xff]
      %v724 = vld [vmem:[#allocation2 + $0x90] sm:$0xff]
      %v725 = vld [vmem:[#allocation2 + $0x98] sm:$0xff]
      %v726 = vld [vmem:[#allocation2 + $0xa8] sm:$0xff]
      %v727 = vld [vmem:[#allocation2 + $0xb0] sm:$0xff]
      %v728 = vld [vmem:[#allocation2 + $0xc0] sm:$0xff]
      %v729 = vld [vmem:[#allocation2 + $0xc8] sm:$0xff]
      %v730 = vld [vmem:[#allocation2 + $0xd8] sm:$0xff]
      %v731 = vld [vmem:[#allocation2 + $0xe0] sm:$0xff]
      %v732 = vld [vmem:[#allocation2 + $0xf0] sm:$0xff]
      %v733 = vld [vmem:[#allocation2 + $0xf8] sm:$0xff]
      %v734 = vld [vmem:[#allocation2 + $0x108] sm:$0xff]
      %v735 = vld [vmem:[#allocation2 + $0x110] sm:$0xff]
      %v736 = vld [vmem:[#allocation2 + $0x120] sm:$0xff]
      %v737 = vld [vmem:[#allocation2 + $0x128] sm:$0xff]
      %v738 = vld [vmem:[#allocation2 + $0x138] sm:$0xff]
      %v739 = vld [vmem:[#allocation2 + $0x140] sm:$0xff]
      %v740 = vld [vmem:[#allocation2 + $0x150] sm:$0xff]
      %v741 = vld [vmem:[#allocation2 + $0x158] sm:$0xff]
      %v742 = vld [vmem:[#allocation2 + $0x168] sm:$0xff]
      %v743 = vld [vmem:[#allocation2 + $0x170] sm:$0xff]
      %v744 = vld [vmem:[%s4] sm:$0x1]
      %v746 = vperm.slane %v744, 0
      %v748 = vmul.f32 %v712, %v746
      %v749 = vmul.f32 %v713, %v746
      %v750 = vmul.f32 %v714, %v746
      %v751 = vmul.f32 %v715, %v746
      %v752 = vmul.f32 %v716, %v746
      %v753 = vmul.f32 %v717, %v746
      %v754 = vmul.f32 %v718, %v746
      %v755 = vmul.f32 %v719, %v746
      %v756 = vmul.f32 %v720, %v746
      %v757 = vmul.f32 %v721, %v746
      %v758 = vmul.f32 %v722, %v746
      %v759 = vmul.f32 %v723, %v746
      %v760 = vmul.f32 %v724, %v746
      %v761 = vmul.f32 %v725, %v746
      %v762 = vmul.f32 %v726, %v746
      %v763 = vmul.f32 %v727, %v746
      %v764 = vmul.f32 %v728, %v746
      %v765 = vmul.f32 %v729, %v746
      %v766 = vmul.f32 %v730, %v746
      %v767 = vmul.f32 %v731, %v746
      %v768 = vmul.f32 %v732, %v746
      %v769 = vmul.f32 %v733, %v746
      %v770 = vmul.f32 %v734, %v746
      %v771 = vmul.f32 %v735, %v746
      %v772 = vmul.f32 %v736, %v746
      %v773 = vmul.f32 %v737, %v746
      %v774 = vmul.f32 %v738, %v746
      %v775 = vmul.f32 %v739, %v746
      %v776 = vmul.f32 %v740, %v746
      %v777 = vmul.f32 %v741, %v746
      %v778 = vmul.f32 %v742, %v746
      %v779 = vmul.f32 %v743, %v746
      %v780 = vld [vmem:[#allocation2 + $0x1] sm:$0xff]
      %v781 = vld [vmem:[#allocation2 + $0x9] sm:$0xff]
      %v782 = vld [vmem:[#allocation2 + $0x19] sm:$0xff]
      %v783 = vld [vmem:[#allocation2 + $0x21] sm:$0xff]
      %v784 = vld [vmem:[#allocation2 + $0x31] sm:$0xff]
      %v785 = vld [vmem:[#allocation2 + $0x39] sm:$0xff]
      %v786 = vld [vmem:[#allocation2 + $0x49] sm:$0xff]
      %v787 = vld [vmem:[#allocation2 + $0x51] sm:$0xff]
      %v788 = vld [vmem:[#allocation2 + $0x61] sm:$0xff]
      %v789 = vld [vmem:[#allocation2 + $0x69] sm:$0xff]
      %v790 = vld [vmem:[#allocation2 + $0x79] sm:$0xff]
      %v791 = vld [vmem:[#allocation2 + $0x81] sm:$0xff]
      %v792 = vld [vmem:[#allocation2 + $0x91] sm:$0xff]
      %v793 = vld [vmem:[#allocation2 + $0x99] sm:$0xff]
      %v794 = vld [vmem:[#allocation2 + $0xa9] sm:$0xff]
      %v795 = vld [vmem:[#allocation2 + $0xb1] sm:$0xff]
      %v796 = vld [vmem:[#allocation2 + $0xc1] sm:$0xff]
      %v797 = vld [vmem:[#allocation2 + $0xc9] sm:$0xff]
      %v798 = vld [vmem:[#allocation2 + $0xd9] sm:$0xff]
      %v799 = vld [vmem:[#allocation2 + $0xe1] sm:$0xff]
      %v800 = vld [vmem:[#allocation2 + $0xf1] sm:$0xff]
      %v801 = vld [vmem:[#allocation2 + $0xf9] sm:$0xff]
      %v802 = vld [vmem:[#allocation2 + $0x109] sm:$0xff]
      %v803 = vld [vmem:[#allocation2 + $0x111] sm:$0xff]
      %v804 = vld [vmem:[#allocation2 + $0x121] sm:$0xff]
      %v805 = vld [vmem:[#allocation2 + $0x129] sm:$0xff]
      %v806 = vld [vmem:[#allocation2 + $0x139] sm:$0xff]
      %v807 = vld [vmem:[#allocation2 + $0x141] sm:$0xff]
      %v808 = vld [vmem:[#allocation2 + $0x151] sm:$0xff]
      %v809 = vld [vmem:[#allocation2 + $0x159] sm:$0xff]
      %v810 = vld [vmem:[#allocation2 + $0x169] sm:$0xff]
      %v811 = vld [vmem:[#allocation2 + $0x171] sm:$0xff]
      %s812 = scalar_lea.vmem %s4, 1
      %v813 = vld [vmem:[%s812] sm:$0x1]
      %v815 = vperm.slane %v813, 0
      %v817 = vmul.f32 %v780, %v815
      %v818 = vmul.f32 %v781, %v815
      %v819 = vmul.f32 %v782, %v815
      %v820 = vmul.f32 %v783, %v815
      %v821 = vmul.f32 %v784, %v815
      %v822 = vmul.f32 %v785, %v815
      %v823 = vmul.f32 %v786, %v815
      %v824 = vmul.f32 %v787, %v815
      %v825 = vmul.f32 %v788, %v815
      %v826 = vmul.f32 %v789, %v815
      %v827 = vmul.f32 %v790, %v815
      %v828 = vmul.f32 %v791, %v815
      %v829 = vmul.f32 %v792, %v815
      %v830 = vmul.f32 %v793, %v815
      %v831 = vmul.f32 %v794, %v815
      %v832 = vmul.f32 %v795, %v815
      %v833 = vmul.f32 %v796, %v815
      %v834 = vmul.f32 %v797, %v815
      %v835 = vmul.f32 %v798, %v815
      %v836 = vmul.f32 %v799, %v815
      %v837 = vmul.f32 %v800, %v815
      %v838 = vmul.f32 %v801, %v815
      %v839 = vmul.f32 %v802, %v815
      %v840 = vmul.f32 %v803, %v815
      %v841 = vmul.f32 %v804, %v815
      %v842 = vmul.f32 %v805, %v815
      %v843 = vmul.f32 %v806, %v815
      %v844 = vmul.f32 %v807, %v815
      %v845 = vmul.f32 %v808, %v815
      %v846 = vmul.f32 %v809, %v815
      %v847 = vmul.f32 %v810, %v815
      %v848 = vmul.f32 %v811, %v815
      %v849 = vadd.f32 %v748, %v817
      %v850 = vadd.f32 %v749, %v818
      %v851 = vadd.f32 %v750, %v819
      %v852 = vadd.f32 %v751, %v820
      %v853 = vadd.f32 %v752, %v821
      %v854 = vadd.f32 %v753, %v822
      %v855 = vadd.f32 %v754, %v823
      %v856 = vadd.f32 %v755, %v824
      %v857 = vadd.f32 %v756, %v825
      %v858 = vadd.f32 %v757, %v826
      %v859 = vadd.f32 %v758, %v827
      %v860 = vadd.f32 %v759, %v828
      %v861 = vadd.f32 %v760, %v829
      %v862 = vadd.f32 %v761, %v830
      %v863 = vadd.f32 %v762, %v831
      %v864 = vadd.f32 %v763, %v832
      %v865 = vadd.f32 %v764, %v833
      %v866 = vadd.f32 %v765, %v834
      %v867 = vadd.f32 %v766, %v835
      %v868 = vadd.f32 %v767, %v836
      %v869 = vadd.f32 %v768, %v837
      %v870 = vadd.f32 %v769, %v838
      %v871 = vadd.f32 %v770, %v839
      %v872 = vadd.f32 %v771, %v840
      %v873 = vadd.f32 %v772, %v841
      %v874 = vadd.f32 %v773, %v842
      %v875 = vadd.f32 %v774, %v843
      %v876 = vadd.f32 %v775, %v844
      %v877 = vadd.f32 %v776, %v845
      %v878 = vadd.f32 %v777, %v846
      %v879 = vadd.f32 %v778, %v847
      %v880 = vadd.f32 %v779, %v848
      %v881 = vld [vmem:[#allocation2 + $0x2] sm:$0xff]
      %v882 = vld [vmem:[#allocation2 + $0xa] sm:$0xff]
      %v883 = vld [vmem:[#allocation2 + $0x1a] sm:$0xff]
      %v884 = vld [vmem:[#allocation2 + $0x22] sm:$0xff]
      %v885 = vld [vmem:[#allocation2 + $0x32] sm:$0xff]
      %v886 = vld [vmem:[#allocation2 + $0x3a] sm:$0xff]
      %v887 = vld [vmem:[#allocation2 + $0x4a] sm:$0xff]
      %v888 = vld [vmem:[#allocation2 + $0x52] sm:$0xff]
      %v889 = vld [vmem:[#allocation2 + $0x62] sm:$0xff]
      %v890 = vld [vmem:[#allocation2 + $0x6a] sm:$0xff]
      %v891 = vld [vmem:[#allocation2 + $0x7a] sm:$0xff]
      %v892 = vld [vmem:[#allocation2 + $0x82] sm:$0xff]
      %v893 = vld [vmem:[#allocation2 + $0x92] sm:$0xff]
      %v894 = vld [vmem:[#allocation2 + $0x9a] sm:$0xff]
      %v895 = vld [vmem:[#allocation2 + $0xaa] sm:$0xff]
      %v896 = vld [vmem:[#allocation2 + $0xb2] sm:$0xff]
      %v897 = vld [vmem:[#allocation2 + $0xc2] sm:$0xff]
      %v898 = vld [vmem:[#allocation2 + $0xca] sm:$0xff]
      %v899 = vld [vmem:[#allocation2 + $0xda] sm:$0xff]
      %v900 = vld [vmem:[#allocation2 + $0xe2] sm:$0xff]
      %v901 = vld [vmem:[#allocation2 + $0xf2] sm:$0xff]
      %v902 = vld [vmem:[#allocation2 + $0xfa] sm:$0xff]
      %v903 = vld [vmem:[#allocation2 + $0x10a] sm:$0xff]
      %v904 = vld [vmem:[#allocation2 + $0x112] sm:$0xff]
      %v905 = vld [vmem:[#allocation2 + $0x122] sm:$0xff]
      %v906 = vld [vmem:[#allocation2 + $0x12a] sm:$0xff]
      %v907 = vld [vmem:[#allocation2 + $0x13a] sm:$0xff]
      %v908 = vld [vmem:[#allocation2 + $0x142] sm:$0xff]
      %v909 = vld [vmem:[#allocation2 + $0x152] sm:$0xff]
      %v910 = vld [vmem:[#allocation2 + $0x15a] sm:$0xff]
      %v911 = vld [vmem:[#allocation2 + $0x16a] sm:$0xff]
      %v912 = vld [vmem:[#allocation2 + $0x172] sm:$0xff]
      %s913 = scalar_lea.vmem %s4, 2
      %v914 = vld [vmem:[%s913] sm:$0x1]
      %v916 = vperm.slane %v914, 0
      %v918 = vmul.f32 %v881, %v916
      %v919 = vmul.f32 %v882, %v916
      %v920 = vmul.f32 %v883, %v916
      %v921 = vmul.f32 %v884, %v916
      %v922 = vmul.f32 %v885, %v916
      %v923 = vmul.f32 %v886, %v916
      %v924 = vmul.f32 %v887, %v916
      %v925 = vmul.f32 %v888, %v916
      %v926 = vmul.f32 %v889, %v916
      %v927 = vmul.f32 %v890, %v916
      %v928 = vmul.f32 %v891, %v916
      %v929 = vmul.f32 %v892, %v916
      %v930 = vmul.f32 %v893, %v916
      %v931 = vmul.f32 %v894, %v916
      %v932 = vmul.f32 %v895, %v916
      %v933 = vmul.f32 %v896, %v916
      %v934 = vmul.f32 %v897, %v916
      %v935 = vmul.f32 %v898, %v916
      %v936 = vmul.f32 %v899, %v916
      %v937 = vmul.f32 %v900, %v916
      %v938 = vmul.f32 %v901, %v916
      %v939 = vmul.f32 %v902, %v916
      %v940 = vmul.f32 %v903, %v916
      %v941 = vmul.f32 %v904, %v916
      %v942 = vmul.f32 %v905, %v916
      %v943 = vmul.f32 %v906, %v916
      %v944 = vmul.f32 %v907, %v916
      %v945 = vmul.f32 %v908, %v916
      %v946 = vmul.f32 %v909, %v916
      %v947 = vmul.f32 %v910, %v916
      %v948 = vmul.f32 %v911, %v916
      %v949 = vmul.f32 %v912, %v916
      %v950 = vadd.f32 %v849, %v918
      %v951 = vadd.f32 %v850, %v919
      %v952 = vadd.f32 %v851, %v920
      %v953 = vadd.f32 %v852, %v921
      %v954 = vadd.f32 %v853, %v922
      %v955 = vadd.f32 %v854, %v923
      %v956 = vadd.f32 %v855, %v924
      %v957 = vadd.f32 %v856, %v925
      %v958 = vadd.f32 %v857, %v926
      %v959 = vadd.f32 %v858, %v927
      %v960 = vadd.f32 %v859, %v928
      %v961 = vadd.f32 %v860, %v929
      %v962 = vadd.f32 %v861, %v930
      %v963 = vadd.f32 %v862, %v931
      %v964 = vadd.f32 %v863, %v932
      %v965 = vadd.f32 %v864, %v933
      %v966 = vadd.f32 %v865, %v934
      %v967 = vadd.f32 %v866, %v935
      %v968 = vadd.f32 %v867, %v936
      %v969 = vadd.f32 %v868, %v937
      %v970 = vadd.f32 %v869, %v938
      %v971 = vadd.f32 %v870, %v939
      %v972 = vadd.f32 %v871, %v940
      %v973 = vadd.f32 %v872, %v941
      %v974 = vadd.f32 %v873, %v942
      %v975 = vadd.f32 %v874, %v943
      %v976 = vadd.f32 %v875, %v944
      %v977 = vadd.f32 %v876, %v945
      %v978 = vadd.f32 %v877, %v946
      %v979 = vadd.f32 %v878, %v947
      %v980 = vadd.f32 %v879, %v948
      %v981 = vadd.f32 %v880, %v949
      %v982 = vld [vmem:[%s679] sm:$0xff]
      %v983 = vld [vmem:[%s679 + $0x8] sm:$0xff]
      %v984 = vld [vmem:[%s679 + $0x18] sm:$0xff]
      %v985 = vld [vmem:[%s679 + $0x20] sm:$0xff]
      %v986 = vld [vmem:[%s679 + $0x30] sm:$0xff]
      %v987 = vld [vmem:[%s679 + $0x38] sm:$0xff]
      %v988 = vld [vmem:[%s679 + $0x48] sm:$0xff]
      %v989 = vld [vmem:[%s679 + $0x50] sm:$0xff]
      %v990 = vld [vmem:[%s679 + $0x60] sm:$0xff]
      %v991 = vld [vmem:[%s679 + $0x68] sm:$0xff]
      %v992 = vld [vmem:[%s679 + $0x78] sm:$0xff]
      %v993 = vld [vmem:[%s679 + $0x80] sm:$0xff]
      %v994 = vld [vmem:[%s679 + $0x90] sm:$0xff]
      %v995 = vld [vmem:[%s679 + $0x98] sm:$0xff]
      %v996 = vld [vmem:[%s679 + $0xa8] sm:$0xff]
      %v997 = vld [vmem:[%s679 + $0xb0] sm:$0xff]
      %v998 = vld [vmem:[%s679 + $0xc0] sm:$0xff]
      %v999 = vld [vmem:[%s679 + $0xc8] sm:$0xff]
      %v1000 = vld [vmem:[%s679 + $0xd8] sm:$0xff]
      %v1001 = vld [vmem:[%s679 + $0xe0] sm:$0xff]
      %v1002 = vld [vmem:[%s679 + $0xf0] sm:$0xff]
      %v1003 = vld [vmem:[%s679 + $0xf8] sm:$0xff]
      %v1004 = vld [vmem:[%s679 + $0x108] sm:$0xff]
      %v1005 = vld [vmem:[%s679 + $0x110] sm:$0xff]
      %v1006 = vld [vmem:[%s679 + $0x120] sm:$0xff]
      %v1007 = vld [vmem:[%s679 + $0x128] sm:$0xff]
      %v1008 = vld [vmem:[%s679 + $0x138] sm:$0xff]
      %v1009 = vld [vmem:[%s679 + $0x140] sm:$0xff]
      %v1010 = vld [vmem:[%s679 + $0x150] sm:$0xff]
      %v1011 = vld [vmem:[%s679 + $0x158] sm:$0xff]
      %v1012 = vld [vmem:[%s679 + $0x168] sm:$0xff]
      %v1013 = vld [vmem:[%s679 + $0x170] sm:$0xff]
      %s1014 = scalar_lea.vmem %s4, 3
      %v1015 = vld [vmem:[%s1014] sm:$0x1]
      %v1017 = vperm.slane %v1015, 0
      %v1019 = vmul.f32 %v982, %v1017
      %v1020 = vmul.f32 %v983, %v1017
      %v1021 = vmul.f32 %v984, %v1017
      %v1022 = vmul.f32 %v985, %v1017
      %v1023 = vmul.f32 %v986, %v1017
      %v1024 = vmul.f32 %v987, %v1017
      %v1025 = vmul.f32 %v988, %v1017
      %v1026 = vmul.f32 %v989, %v1017
      %v1027 = vmul.f32 %v990, %v1017
      %v1028 = vmul.f32 %v991, %v1017
      %v1029 = vmul.f32 %v992, %v1017
      %v1030 = vmul.f32 %v993, %v1017
      %v1031 = vmul.f32 %v994, %v1017
      %v1032 = vmul.f32 %v995, %v1017
      %v1033 = vmul.f32 %v996, %v1017
      %v1034 = vmul.f32 %v997, %v1017
      %v1035 = vmul.f32 %v998, %v1017
      %v1036 = vmul.f32 %v999, %v1017
      %v1037 = vmul.f32 %v1000, %v1017
      %v1038 = vmul.f32 %v1001, %v1017
      %v1039 = vmul.f32 %v1002, %v1017
      %v1040 = vmul.f32 %v1003, %v1017
      %v1041 = vmul.f32 %v1004, %v1017
      %v1042 = vmul.f32 %v1005, %v1017
      %v1043 = vmul.f32 %v1006, %v1017
      %v1044 = vmul.f32 %v1007, %v1017
      %v1045 = vmul.f32 %v1008, %v1017
      %v1046 = vmul.f32 %v1009, %v1017
      %v1047 = vmul.f32 %v1010, %v1017
      %v1048 = vmul.f32 %v1011, %v1017
      %v1049 = vmul.f32 %v1012, %v1017
      %v1050 = vmul.f32 %v1013, %v1017
      %v1051 = vadd.f32 %v950, %v1019
      %v1052 = vadd.f32 %v951, %v1020
      %v1053 = vadd.f32 %v952, %v1021
      %v1054 = vadd.f32 %v953, %v1022
      %v1055 = vadd.f32 %v954, %v1023
      %v1056 = vadd.f32 %v955, %v1024
      %v1057 = vadd.f32 %v956, %v1025
      %v1058 = vadd.f32 %v957, %v1026
      %v1059 = vadd.f32 %v958, %v1027
      %v1060 = vadd.f32 %v959, %v1028
      %v1061 = vadd.f32 %v960, %v1029
      %v1062 = vadd.f32 %v961, %v1030
      %v1063 = vadd.f32 %v962, %v1031
      %v1064 = vadd.f32 %v963, %v1032
      %v1065 = vadd.f32 %v964, %v1033
      %v1066 = vadd.f32 %v965, %v1034
      %v1067 = vadd.f32 %v966, %v1035
      %v1068 = vadd.f32 %v967, %v1036
      %v1069 = vadd.f32 %v968, %v1037
      %v1070 = vadd.f32 %v969, %v1038
      %v1071 = vadd.f32 %v970, %v1039
      %v1072 = vadd.f32 %v971, %v1040
      %v1073 = vadd.f32 %v972, %v1041
      %v1074 = vadd.f32 %v973, %v1042
      %v1075 = vadd.f32 %v974, %v1043
      %v1076 = vadd.f32 %v975, %v1044
      %v1077 = vadd.f32 %v976, %v1045
      %v1078 = vadd.f32 %v977, %v1046
      %v1079 = vadd.f32 %v978, %v1047
      %v1080 = vadd.f32 %v979, %v1048
      %v1081 = vadd.f32 %v980, %v1049
      %v1082 = vadd.f32 %v981, %v1050
      %v1083 = vld [vmem:[%s679 + $0x1] sm:$0xff]
      %v1084 = vld [vmem:[%s679 + $0x9] sm:$0xff]
      %v1085 = vld [vmem:[%s679 + $0x19] sm:$0xff]
      %v1086 = vld [vmem:[%s679 + $0x21] sm:$0xff]
      %v1087 = vld [vmem:[%s679 + $0x31] sm:$0xff]
      %v1088 = vld [vmem:[%s679 + $0x39] sm:$0xff]
      %v1089 = vld [vmem:[%s679 + $0x49] sm:$0xff]
      %v1090 = vld [vmem:[%s679 + $0x51] sm:$0xff]
      %v1091 = vld [vmem:[%s679 + $0x61] sm:$0xff]
      %v1092 = vld [vmem:[%s679 + $0x69] sm:$0xff]
      %v1093 = vld [vmem:[%s679 + $0x79] sm:$0xff]
      %v1094 = vld [vmem:[%s679 + $0x81] sm:$0xff]
      %v1095 = vld [vmem:[%s679 + $0x91] sm:$0xff]
      %v1096 = vld [vmem:[%s679 + $0x99] sm:$0xff]
      %v1097 = vld [vmem:[%s679 + $0xa9] sm:$0xff]
      %v1098 = vld [vmem:[%s679 + $0xb1] sm:$0xff]
      %v1099 = vld [vmem:[%s679 + $0xc1] sm:$0xff]
      %v1100 = vld [vmem:[%s679 + $0xc9] sm:$0xff]
      %v1101 = vld [vmem:[%s679 + $0xd9] sm:$0xff]
      %v1102 = vld [vmem:[%s679 + $0xe1] sm:$0xff]
      %v1103 = vld [vmem:[%s679 + $0xf1] sm:$0xff]
      %v1104 = vld [vmem:[%s679 + $0xf9] sm:$0xff]
      %v1105 = vld [vmem:[%s679 + $0x109] sm:$0xff]
      %v1106 = vld [vmem:[%s679 + $0x111] sm:$0xff]
      %v1107 = vld [vmem:[%s679 + $0x121] sm:$0xff]
      %v1108 = vld [vmem:[%s679 + $0x129] sm:$0xff]
      %v1109 = vld [vmem:[%s679 + $0x139] sm:$0xff]
      %v1110 = vld [vmem:[%s679 + $0x141] sm:$0xff]
      %v1111 = vld [vmem:[%s679 + $0x151] sm:$0xff]
      %v1112 = vld [vmem:[%s679 + $0x159] sm:$0xff]
      %v1113 = vld [vmem:[%s679 + $0x169] sm:$0xff]
      %v1114 = vld [vmem:[%s679 + $0x171] sm:$0xff]
      %s1115 = scalar_lea.vmem %s4, 4
      %v1116 = vld [vmem:[%s1115] sm:$0x1]
      %v1118 = vperm.slane %v1116, 0
      %v1120 = vmul.f32 %v1083, %v1118
      %v1121 = vmul.f32 %v1084, %v1118
      %v1122 = vmul.f32 %v1085, %v1118
      %v1123 = vmul.f32 %v1086, %v1118
      %v1124 = vmul.f32 %v1087, %v1118
      %v1125 = vmul.f32 %v1088, %v1118
      %v1126 = vmul.f32 %v1089, %v1118
      %v1127 = vmul.f32 %v1090, %v1118
      %v1128 = vmul.f32 %v1091, %v1118
      %v1129 = vmul.f32 %v1092, %v1118
      %v1130 = vmul.f32 %v1093, %v1118
      %v1131 = vmul.f32 %v1094, %v1118
      %v1132 = vmul.f32 %v1095, %v1118
      %v1133 = vmul.f32 %v1096, %v1118
      %v1134 = vmul.f32 %v1097, %v1118
      %v1135 = vmul.f32 %v1098, %v1118
      %v1136 = vmul.f32 %v1099, %v1118
      %v1137 = vmul.f32 %v1100, %v1118
      %v1138 = vmul.f32 %v1101, %v1118
      %v1139 = vmul.f32 %v1102, %v1118
      %v1140 = vmul.f32 %v1103, %v1118
      %v1141 = vmul.f32 %v1104, %v1118
      %v1142 = vmul.f32 %v1105, %v1118
      %v1143 = vmul.f32 %v1106, %v1118
      %v1144 = vmul.f32 %v1107, %v1118
      %v1145 = vmul.f32 %v1108, %v1118
      %v1146 = vmul.f32 %v1109, %v1118
      %v1147 = vmul.f32 %v1110, %v1118
      %v1148 = vmul.f32 %v1111, %v1118
      %v1149 = vmul.f32 %v1112, %v1118
      %v1150 = vmul.f32 %v1113, %v1118
      %v1151 = vmul.f32 %v1114, %v1118
      %v1152 = vadd.f32 %v1051, %v1120
      %v1153 = vadd.f32 %v1052, %v1121
      %v1154 = vadd.f32 %v1053, %v1122
      %v1155 = vadd.f32 %v1054, %v1123
      %v1156 = vadd.f32 %v1055, %v1124
      %v1157 = vadd.f32 %v1056, %v1125
      %v1158 = vadd.f32 %v1057, %v1126
      %v1159 = vadd.f32 %v1058, %v1127
      %v1160 = vadd.f32 %v1059, %v1128
      %v1161 = vadd.f32 %v1060, %v1129
      %v1162 = vadd.f32 %v1061, %v1130
      %v1163 = vadd.f32 %v1062, %v1131
      %v1164 = vadd.f32 %v1063, %v1132
      %v1165 = vadd.f32 %v1064, %v1133
      %v1166 = vadd.f32 %v1065, %v1134
      %v1167 = vadd.f32 %v1066, %v1135
      %v1168 = vadd.f32 %v1067, %v1136
      %v1169 = vadd.f32 %v1068, %v1137
      %v1170 = vadd.f32 %v1069, %v1138
      %v1171 = vadd.f32 %v1070, %v1139
      %v1172 = vadd.f32 %v1071, %v1140
      %v1173 = vadd.f32 %v1072, %v1141
      %v1174 = vadd.f32 %v1073, %v1142
      %v1175 = vadd.f32 %v1074, %v1143
      %v1176 = vadd.f32 %v1075, %v1144
      %v1177 = vadd.f32 %v1076, %v1145
      %v1178 = vadd.f32 %v1077, %v1146
      %v1179 = vadd.f32 %v1078, %v1147
      %v1180 = vadd.f32 %v1079, %v1148
      %v1181 = vadd.f32 %v1080, %v1149
      %v1182 = vadd.f32 %v1081, %v1150
      %v1183 = vadd.f32 %v1082, %v1151
      %v1184 = vld [vmem:[%s679 + $0x2] sm:$0xff]
      %v1185 = vld [vmem:[%s679 + $0xa] sm:$0xff]
      %v1186 = vld [vmem:[%s679 + $0x1a] sm:$0xff]
      %v1187 = vld [vmem:[%s679 + $0x22] sm:$0xff]
      %v1188 = vld [vmem:[%s679 + $0x32] sm:$0xff]
      %v1189 = vld [vmem:[%s679 + $0x3a] sm:$0xff]
      %v1190 = vld [vmem:[%s679 + $0x4a] sm:$0xff]
      %v1191 = vld [vmem:[%s679 + $0x52] sm:$0xff]
      %v1192 = vld [vmem:[%s679 + $0x62] sm:$0xff]
      %v1193 = vld [vmem:[%s679 + $0x6a] sm:$0xff]
      %v1194 = vld [vmem:[%s679 + $0x7a] sm:$0xff]
      %v1195 = vld [vmem:[%s679 + $0x82] sm:$0xff]
      %v1196 = vld [vmem:[%s679 + $0x92] sm:$0xff]
      %v1197 = vld [vmem:[%s679 + $0x9a] sm:$0xff]
      %v1198 = vld [vmem:[%s679 + $0xaa] sm:$0xff]
      %v1199 = vld [vmem:[%s679 + $0xb2] sm:$0xff]
      %v1200 = vld [vmem:[%s679 + $0xc2] sm:$0xff]
      %v1201 = vld [vmem:[%s679 + $0xca] sm:$0xff]
      %v1202 = vld [vmem:[%s679 + $0xda] sm:$0xff]
      %v1203 = vld [vmem:[%s679 + $0xe2] sm:$0xff]
      %v1204 = vld [vmem:[%s679 + $0xf2] sm:$0xff]
      %v1205 = vld [vmem:[%s679 + $0xfa] sm:$0xff]
      %v1206 = vld [vmem:[%s679 + $0x10a] sm:$0xff]
      %v1207 = vld [vmem:[%s679 + $0x112] sm:$0xff]
      %v1208 = vld [vmem:[%s679 + $0x122] sm:$0xff]
      %v1209 = vld [vmem:[%s679 + $0x12a] sm:$0xff]
      %v1210 = vld [vmem:[%s679 + $0x13a] sm:$0xff]
      %v1211 = vld [vmem:[%s679 + $0x142] sm:$0xff]
      %v1212 = vld [vmem:[%s679 + $0x152] sm:$0xff]
      %v1213 = vld [vmem:[%s679 + $0x15a] sm:$0xff]
      %v1214 = vld [vmem:[%s679 + $0x16a] sm:$0xff]
      %v1215 = vld [vmem:[%s679 + $0x172] sm:$0xff]
      %s1216 = scalar_lea.vmem %s4, 5
      %v1217 = vld [vmem:[%s1216] sm:$0x1]
      %v1219 = vperm.slane %v1217, 0
      %v1221 = vmul.f32 %v1184, %v1219
      %v1222 = vmul.f32 %v1185, %v1219
      %v1223 = vmul.f32 %v1186, %v1219
      %v1224 = vmul.f32 %v1187, %v1219
      %v1225 = vmul.f32 %v1188, %v1219
      %v1226 = vmul.f32 %v1189, %v1219
      %v1227 = vmul.f32 %v1190, %v1219
      %v1228 = vmul.f32 %v1191, %v1219
      %v1229 = vmul.f32 %v1192, %v1219
      %v1230 = vmul.f32 %v1193, %v1219
      %v1231 = vmul.f32 %v1194, %v1219
      %v1232 = vmul.f32 %v1195, %v1219
      %v1233 = vmul.f32 %v1196, %v1219
      %v1234 = vmul.f32 %v1197, %v1219
      %v1235 = vmul.f32 %v1198, %v1219
      %v1236 = vmul.f32 %v1199, %v1219
      %v1237 = vmul.f32 %v1200, %v1219
      %v1238 = vmul.f32 %v1201, %v1219
      %v1239 = vmul.f32 %v1202, %v1219
      %v1240 = vmul.f32 %v1203, %v1219
      %v1241 = vmul.f32 %v1204, %v1219
      %v1242 = vmul.f32 %v1205, %v1219
      %v1243 = vmul.f32 %v1206, %v1219
      %v1244 = vmul.f32 %v1207, %v1219
      %v1245 = vmul.f32 %v1208, %v1219
      %v1246 = vmul.f32 %v1209, %v1219
      %v1247 = vmul.f32 %v1210, %v1219
      %v1248 = vmul.f32 %v1211, %v1219
      %v1249 = vmul.f32 %v1212, %v1219
      %v1250 = vmul.f32 %v1213, %v1219
      %v1251 = vmul.f32 %v1214, %v1219
      %v1252 = vmul.f32 %v1215, %v1219
      %v1253 = vadd.f32 %v1152, %v1221
      %v1254 = vadd.f32 %v1153, %v1222
      %v1255 = vadd.f32 %v1154, %v1223
      %v1256 = vadd.f32 %v1155, %v1224
      %v1257 = vadd.f32 %v1156, %v1225
      %v1258 = vadd.f32 %v1157, %v1226
      %v1259 = vadd.f32 %v1158, %v1227
      %v1260 = vadd.f32 %v1159, %v1228
      %v1261 = vadd.f32 %v1160, %v1229
      %v1262 = vadd.f32 %v1161, %v1230
      %v1263 = vadd.f32 %v1162, %v1231
      %v1264 = vadd.f32 %v1163, %v1232
      %v1265 = vadd.f32 %v1164, %v1233
      %v1266 = vadd.f32 %v1165, %v1234
      %v1267 = vadd.f32 %v1166, %v1235
      %v1268 = vadd.f32 %v1167, %v1236
      %v1269 = vadd.f32 %v1168, %v1237
      %v1270 = vadd.f32 %v1169, %v1238
      %v1271 = vadd.f32 %v1170, %v1239
      %v1272 = vadd.f32 %v1171, %v1240
      %v1273 = vadd.f32 %v1172, %v1241
      %v1274 = vadd.f32 %v1173, %v1242
      %v1275 = vadd.f32 %v1174, %v1243
      %v1276 = vadd.f32 %v1175, %v1244
      %v1277 = vadd.f32 %v1176, %v1245
      %v1278 = vadd.f32 %v1177, %v1246
      %v1279 = vadd.f32 %v1178, %v1247
      %v1280 = vadd.f32 %v1179, %v1248
      %v1281 = vadd.f32 %v1180, %v1249
      %v1282 = vadd.f32 %v1181, %v1250
      %v1283 = vadd.f32 %v1182, %v1251
      %v1284 = vadd.f32 %v1183, %v1252
      %s1285 = scalar_lea.vmem [#allocation2], 48
      %v1286 = vld [vmem:[%s1285] sm:$0xff]
      %v1287 = vld [vmem:[%s1285 + $0x8] sm:$0xff]
      %v1288 = vld [vmem:[%s1285 + $0x18] sm:$0xff]
      %v1289 = vld [vmem:[%s1285 + $0x20] sm:$0xff]
      %v1290 = vld [vmem:[%s1285 + $0x30] sm:$0xff]
      %v1291 = vld [vmem:[%s1285 + $0x38] sm:$0xff]
      %v1292 = vld [vmem:[%s1285 + $0x48] sm:$0xff]
      %v1293 = vld [vmem:[%s1285 + $0x50] sm:$0xff]
      %v1294 = vld [vmem:[%s1285 + $0x60] sm:$0xff]
      %v1295 = vld [vmem:[%s1285 + $0x68] sm:$0xff]
      %v1296 = vld [vmem:[%s1285 + $0x78] sm:$0xff]
      %v1297 = vld [vmem:[%s1285 + $0x80] sm:$0xff]
      %v1298 = vld [vmem:[%s1285 + $0x90] sm:$0xff]
      %v1299 = vld [vmem:[%s1285 + $0x98] sm:$0xff]
      %v1300 = vld [vmem:[%s1285 + $0xa8] sm:$0xff]
      %v1301 = vld [vmem:[%s1285 + $0xb0] sm:$0xff]
      %v1302 = vld [vmem:[%s1285 + $0xc0] sm:$0xff]
      %v1303 = vld [vmem:[%s1285 + $0xc8] sm:$0xff]
      %v1304 = vld [vmem:[%s1285 + $0xd8] sm:$0xff]
      %v1305 = vld [vmem:[%s1285 + $0xe0] sm:$0xff]
      %v1306 = vld [vmem:[%s1285 + $0xf0] sm:$0xff]
      %v1307 = vld [vmem:[%s1285 + $0xf8] sm:$0xff]
      %v1308 = vld [vmem:[%s1285 + $0x108] sm:$0xff]
      %v1309 = vld [vmem:[%s1285 + $0x110] sm:$0xff]
      %v1310 = vld [vmem:[%s1285 + $0x120] sm:$0xff]
      %v1311 = vld [vmem:[%s1285 + $0x128] sm:$0xff]
      %v1312 = vld [vmem:[%s1285 + $0x138] sm:$0xff]
      %v1313 = vld [vmem:[%s1285 + $0x140] sm:$0xff]
      %v1314 = vld [vmem:[%s1285 + $0x150] sm:$0xff]
      %v1315 = vld [vmem:[%s1285 + $0x158] sm:$0xff]
      %v1316 = vld [vmem:[%s1285 + $0x168] sm:$0xff]
      %v1317 = vld [vmem:[%s1285 + $0x170] sm:$0xff]
      %s1318 = scalar_lea.vmem %s4, 6
      %v1319 = vld [vmem:[%s1318] sm:$0x1]
      %v1321 = vperm.slane %v1319, 0
      %v1323 = vmul.f32 %v1286, %v1321
      %v1324 = vmul.f32 %v1287, %v1321
      %v1325 = vmul.f32 %v1288, %v1321
      %v1326 = vmul.f32 %v1289, %v1321
      %v1327 = vmul.f32 %v1290, %v1321
      %v1328 = vmul.f32 %v1291, %v1321
      %v1329 = vmul.f32 %v1292, %v1321
      %v1330 = vmul.f32 %v1293, %v1321
      %v1331 = vmul.f32 %v1294, %v1321
      %v1332 = vmul.f32 %v1295, %v1321
      %v1333 = vmul.f32 %v1296, %v1321
      %v1334 = vmul.f32 %v1297, %v1321
      %v1335 = vmul.f32 %v1298, %v1321
      %v1336 = vmul.f32 %v1299, %v1321
      %v1337 = vmul.f32 %v1300, %v1321
      %v1338 = vmul.f32 %v1301, %v1321
      %v1339 = vmul.f32 %v1302, %v1321
      %v1340 = vmul.f32 %v1303, %v1321
      %v1341 = vmul.f32 %v1304, %v1321
      %v1342 = vmul.f32 %v1305, %v1321
      %v1343 = vmul.f32 %v1306, %v1321
      %v1344 = vmul.f32 %v1307, %v1321
      %v1345 = vmul.f32 %v1308, %v1321
      %v1346 = vmul.f32 %v1309, %v1321
      %v1347 = vmul.f32 %v1310, %v1321
      %v1348 = vmul.f32 %v1311, %v1321
      %v1349 = vmul.f32 %v1312, %v1321
      %v1350 = vmul.f32 %v1313, %v1321
      %v1351 = vmul.f32 %v1314, %v1321
      %v1352 = vmul.f32 %v1315, %v1321
      %v1353 = vmul.f32 %v1316, %v1321
      %v1354 = vmul.f32 %v1317, %v1321
      %v1355 = vadd.f32 %v1253, %v1323
      %v1356 = vadd.f32 %v1254, %v1324
      %v1357 = vadd.f32 %v1255, %v1325
      %v1358 = vadd.f32 %v1256, %v1326
      %v1359 = vadd.f32 %v1257, %v1327
      %v1360 = vadd.f32 %v1258, %v1328
      %v1361 = vadd.f32 %v1259, %v1329
      %v1362 = vadd.f32 %v1260, %v1330
      %v1363 = vadd.f32 %v1261, %v1331
      %v1364 = vadd.f32 %v1262, %v1332
      %v1365 = vadd.f32 %v1263, %v1333
      %v1366 = vadd.f32 %v1264, %v1334
      %v1367 = vadd.f32 %v1265, %v1335
      %v1368 = vadd.f32 %v1266, %v1336
      %v1369 = vadd.f32 %v1267, %v1337
      %v1370 = vadd.f32 %v1268, %v1338
      %v1371 = vadd.f32 %v1269, %v1339
      %v1372 = vadd.f32 %v1270, %v1340
      %v1373 = vadd.f32 %v1271, %v1341
      %v1374 = vadd.f32 %v1272, %v1342
      %v1375 = vadd.f32 %v1273, %v1343
      %v1376 = vadd.f32 %v1274, %v1344
      %v1377 = vadd.f32 %v1275, %v1345
      %v1378 = vadd.f32 %v1276, %v1346
      %v1379 = vadd.f32 %v1277, %v1347
      %v1380 = vadd.f32 %v1278, %v1348
      %v1381 = vadd.f32 %v1279, %v1349
      %v1382 = vadd.f32 %v1280, %v1350
      %v1383 = vadd.f32 %v1281, %v1351
      %v1384 = vadd.f32 %v1282, %v1352
      %v1385 = vadd.f32 %v1283, %v1353
      %v1386 = vadd.f32 %v1284, %v1354
      %v1387 = vld [vmem:[%s1285 + $0x1] sm:$0xff]
      %v1388 = vld [vmem:[%s1285 + $0x9] sm:$0xff]
      %v1389 = vld [vmem:[%s1285 + $0x19] sm:$0xff]
      %v1390 = vld [vmem:[%s1285 + $0x21] sm:$0xff]
      %v1391 = vld [vmem:[%s1285 + $0x31] sm:$0xff]
      %v1392 = vld [vmem:[%s1285 + $0x39] sm:$0xff]
      %v1393 = vld [vmem:[%s1285 + $0x49] sm:$0xff]
      %v1394 = vld [vmem:[%s1285 + $0x51] sm:$0xff]
      %v1395 = vld [vmem:[%s1285 + $0x61] sm:$0xff]
      %v1396 = vld [vmem:[%s1285 + $0x69] sm:$0xff]
      %v1397 = vld [vmem:[%s1285 + $0x79] sm:$0xff]
      %v1398 = vld [vmem:[%s1285 + $0x81] sm:$0xff]
      %v1399 = vld [vmem:[%s1285 + $0x91] sm:$0xff]
      %v1400 = vld [vmem:[%s1285 + $0x99] sm:$0xff]
      %v1401 = vld [vmem:[%s1285 + $0xa9] sm:$0xff]
      %v1402 = vld [vmem:[%s1285 + $0xb1] sm:$0xff]
      %v1403 = vld [vmem:[%s1285 + $0xc1] sm:$0xff]
      %v1404 = vld [vmem:[%s1285 + $0xc9] sm:$0xff]
      %v1405 = vld [vmem:[%s1285 + $0xd9] sm:$0xff]
      %v1406 = vld [vmem:[%s1285 + $0xe1] sm:$0xff]
      %v1407 = vld [vmem:[%s1285 + $0xf1] sm:$0xff]
      %v1408 = vld [vmem:[%s1285 + $0xf9] sm:$0xff]
      %v1409 = vld [vmem:[%s1285 + $0x109] sm:$0xff]
      %v1410 = vld [vmem:[%s1285 + $0x111] sm:$0xff]
      %v1411 = vld [vmem:[%s1285 + $0x121] sm:$0xff]
      %v1412 = vld [vmem:[%s1285 + $0x129] sm:$0xff]
      %v1413 = vld [vmem:[%s1285 + $0x139] sm:$0xff]
      %v1414 = vld [vmem:[%s1285 + $0x141] sm:$0xff]
      %v1415 = vld [vmem:[%s1285 + $0x151] sm:$0xff]
      %v1416 = vld [vmem:[%s1285 + $0x159] sm:$0xff]
      %v1417 = vld [vmem:[%s1285 + $0x169] sm:$0xff]
      %v1418 = vld [vmem:[%s1285 + $0x171] sm:$0xff]
      %s1419 = scalar_lea.vmem %s4, 7
      %v1420 = vld [vmem:[%s1419] sm:$0x1]
      %v1422 = vperm.slane %v1420, 0
      %v1424 = vmul.f32 %v1387, %v1422
      %v1425 = vmul.f32 %v1388, %v1422
      %v1426 = vmul.f32 %v1389, %v1422
      %v1427 = vmul.f32 %v1390, %v1422
      %v1428 = vmul.f32 %v1391, %v1422
      %v1429 = vmul.f32 %v1392, %v1422
      %v1430 = vmul.f32 %v1393, %v1422
      %v1431 = vmul.f32 %v1394, %v1422
      %v1432 = vmul.f32 %v1395, %v1422
      %v1433 = vmul.f32 %v1396, %v1422
      %v1434 = vmul.f32 %v1397, %v1422
      %v1435 = vmul.f32 %v1398, %v1422
      %v1436 = vmul.f32 %v1399, %v1422
      %v1437 = vmul.f32 %v1400, %v1422
      %v1438 = vmul.f32 %v1401, %v1422
      %v1439 = vmul.f32 %v1402, %v1422
      %v1440 = vmul.f32 %v1403, %v1422
      %v1441 = vmul.f32 %v1404, %v1422
      %v1442 = vmul.f32 %v1405, %v1422
      %v1443 = vmul.f32 %v1406, %v1422
      %v1444 = vmul.f32 %v1407, %v1422
      %v1445 = vmul.f32 %v1408, %v1422
      %v1446 = vmul.f32 %v1409, %v1422
      %v1447 = vmul.f32 %v1410, %v1422
      %v1448 = vmul.f32 %v1411, %v1422
      %v1449 = vmul.f32 %v1412, %v1422
      %v1450 = vmul.f32 %v1413, %v1422
      %v1451 = vmul.f32 %v1414, %v1422
      %v1452 = vmul.f32 %v1415, %v1422
      %v1453 = vmul.f32 %v1416, %v1422
      %v1454 = vmul.f32 %v1417, %v1422
      %v1455 = vmul.f32 %v1418, %v1422
      %v1456 = vadd.f32 %v1355, %v1424
      %v1457 = vadd.f32 %v1356, %v1425
      %v1458 = vadd.f32 %v1357, %v1426
      %v1459 = vadd.f32 %v1358, %v1427
      %v1460 = vadd.f32 %v1359, %v1428
      %v1461 = vadd.f32 %v1360, %v1429
      %v1462 = vadd.f32 %v1361, %v1430
      %v1463 = vadd.f32 %v1362, %v1431
      %v1464 = vadd.f32 %v1363, %v1432
      %v1465 = vadd.f32 %v1364, %v1433
      %v1466 = vadd.f32 %v1365, %v1434
      %v1467 = vadd.f32 %v1366, %v1435
      %v1468 = vadd.f32 %v1367, %v1436
      %v1469 = vadd.f32 %v1368, %v1437
      %v1470 = vadd.f32 %v1369, %v1438
      %v1471 = vadd.f32 %v1370, %v1439
      %v1472 = vadd.f32 %v1371, %v1440
      %v1473 = vadd.f32 %v1372, %v1441
      %v1474 = vadd.f32 %v1373, %v1442
      %v1475 = vadd.f32 %v1374, %v1443
      %v1476 = vadd.f32 %v1375, %v1444
      %v1477 = vadd.f32 %v1376, %v1445
      %v1478 = vadd.f32 %v1377, %v1446
      %v1479 = vadd.f32 %v1378, %v1447
      %v1480 = vadd.f32 %v1379, %v1448
      %v1481 = vadd.f32 %v1380, %v1449
      %v1482 = vadd.f32 %v1381, %v1450
      %v1483 = vadd.f32 %v1382, %v1451
      %v1484 = vadd.f32 %v1383, %v1452
      %v1485 = vadd.f32 %v1384, %v1453
      %v1486 = vadd.f32 %v1385, %v1454
      %v1487 = vadd.f32 %v1386, %v1455
      %v1488 = vld [vmem:[%s1285 + $0x2] sm:$0xff]
      %v1489 = vld [vmem:[%s1285 + $0xa] sm:$0xff]
      %v1490 = vld [vmem:[%s1285 + $0x1a] sm:$0xff]
      %v1491 = vld [vmem:[%s1285 + $0x22] sm:$0xff]
      %v1492 = vld [vmem:[%s1285 + $0x32] sm:$0xff]
      %v1493 = vld [vmem:[%s1285 + $0x3a] sm:$0xff]
      %v1494 = vld [vmem:[%s1285 + $0x4a] sm:$0xff]
      %v1495 = vld [vmem:[%s1285 + $0x52] sm:$0xff]
      %v1496 = vld [vmem:[%s1285 + $0x62] sm:$0xff]
      %v1497 = vld [vmem:[%s1285 + $0x6a] sm:$0xff]
      %v1498 = vld [vmem:[%s1285 + $0x7a] sm:$0xff]
      %v1499 = vld [vmem:[%s1285 + $0x82] sm:$0xff]
      %v1500 = vld [vmem:[%s1285 + $0x92] sm:$0xff]
      %v1501 = vld [vmem:[%s1285 + $0x9a] sm:$0xff]
      %v1502 = vld [vmem:[%s1285 + $0xaa] sm:$0xff]
      %v1503 = vld [vmem:[%s1285 + $0xb2] sm:$0xff]
      %v1504 = vld [vmem:[%s1285 + $0xc2] sm:$0xff]
      %v1505 = vld [vmem:[%s1285 + $0xca] sm:$0xff]
      %v1506 = vld [vmem:[%s1285 + $0xda] sm:$0xff]
      %v1507 = vld [vmem:[%s1285 + $0xe2] sm:$0xff]
      %v1508 = vld [vmem:[%s1285 + $0xf2] sm:$0xff]
      %v1509 = vld [vmem:[%s1285 + $0xfa] sm:$0xff]
      %v1510 = vld [vmem:[%s1285 + $0x10a] sm:$0xff]
      %v1511 = vld [vmem:[%s1285 + $0x112] sm:$0xff]
      %v1512 = vld [vmem:[%s1285 + $0x122] sm:$0xff]
      %v1513 = vld [vmem:[%s1285 + $0x12a] sm:$0xff]
      %v1514 = vld [vmem:[%s1285 + $0x13a] sm:$0xff]
      %v1515 = vld [vmem:[%s1285 + $0x142] sm:$0xff]
      %v1516 = vld [vmem:[%s1285 + $0x152] sm:$0xff]
      %v1517 = vld [vmem:[%s1285 + $0x15a] sm:$0xff]
      %v1518 = vld [vmem:[%s1285 + $0x16a] sm:$0xff]
      %v1519 = vld [vmem:[%s1285 + $0x172] sm:$0xff]
      %s1520 = scalar_lea.vmem %s4, 8
      %v1521 = vld [vmem:[%s1520] sm:$0x1]
      %v1523 = vperm.slane %v1521, 0
      %v1525 = vmul.f32 %v1488, %v1523
      %v1526 = vmul.f32 %v1489, %v1523
      %v1527 = vmul.f32 %v1490, %v1523
      %v1528 = vmul.f32 %v1491, %v1523
      %v1529 = vmul.f32 %v1492, %v1523
      %v1530 = vmul.f32 %v1493, %v1523
      %v1531 = vmul.f32 %v1494, %v1523
      %v1532 = vmul.f32 %v1495, %v1523
      %v1533 = vmul.f32 %v1496, %v1523
      %v1534 = vmul.f32 %v1497, %v1523
      %v1535 = vmul.f32 %v1498, %v1523
      %v1536 = vmul.f32 %v1499, %v1523
      %v1537 = vmul.f32 %v1500, %v1523
      %v1538 = vmul.f32 %v1501, %v1523
      %v1539 = vmul.f32 %v1502, %v1523
      %v1540 = vmul.f32 %v1503, %v1523
      %v1541 = vmul.f32 %v1504, %v1523
      %v1542 = vmul.f32 %v1505, %v1523
      %v1543 = vmul.f32 %v1506, %v1523
      %v1544 = vmul.f32 %v1507, %v1523
      %v1545 = vmul.f32 %v1508, %v1523
      %v1546 = vmul.f32 %v1509, %v1523
      %v1547 = vmul.f32 %v1510, %v1523
      %v1548 = vmul.f32 %v1511, %v1523
      %v1549 = vmul.f32 %v1512, %v1523
      %v1550 = vmul.f32 %v1513, %v1523
      %v1551 = vmul.f32 %v1514, %v1523
      %v1552 = vmul.f32 %v1515, %v1523
      %v1553 = vmul.f32 %v1516, %v1523
      %v1554 = vmul.f32 %v1517, %v1523
      %v1555 = vmul.f32 %v1518, %v1523
      %v1556 = vmul.f32 %v1519, %v1523
      %v1557 = vadd.f32 %v1456, %v1525
      %v1558 = vadd.f32 %v1457, %v1526
      %v1559 = vadd.f32 %v1458, %v1527
      %v1560 = vadd.f32 %v1459, %v1528
      %v1561 = vadd.f32 %v1460, %v1529
      %v1562 = vadd.f32 %v1461, %v1530
      %v1563 = vadd.f32 %v1462, %v1531
      %v1564 = vadd.f32 %v1463, %v1532
      %v1565 = vadd.f32 %v1464, %v1533
      %v1566 = vadd.f32 %v1465, %v1534
      %v1567 = vadd.f32 %v1466, %v1535
      %v1568 = vadd.f32 %v1467, %v1536
      %v1569 = vadd.f32 %v1468, %v1537
      %v1570 = vadd.f32 %v1469, %v1538
      %v1571 = vadd.f32 %v1470, %v1539
      %v1572 = vadd.f32 %v1471, %v1540
      %v1573 = vadd.f32 %v1472, %v1541
      %v1574 = vadd.f32 %v1473, %v1542
      %v1575 = vadd.f32 %v1474, %v1543
      %v1576 = vadd.f32 %v1475, %v1544
      %v1577 = vadd.f32 %v1476, %v1545
      %v1578 = vadd.f32 %v1477, %v1546
      %v1579 = vadd.f32 %v1478, %v1547
      %v1580 = vadd.f32 %v1479, %v1548
      %v1581 = vadd.f32 %v1480, %v1549
      %v1582 = vadd.f32 %v1481, %v1550
      %v1583 = vadd.f32 %v1482, %v1551
      %v1584 = vadd.f32 %v1483, %v1552
      %v1585 = vadd.f32 %v1484, %v1553
      %v1586 = vadd.f32 %v1485, %v1554
      %v1587 = vadd.f32 %v1486, %v1555
      %v1588 = vadd.f32 %v1487, %v1556
      %v1589 = vld [vmem:[%s5] sm:$0x1]
      %v1591 = vperm.slane %v1589, 0
      %v1593 = vmul.f32 %v1557, %v1591
      %v1594 = vmul.f32 %v1558, %v1591
      %v1595 = vmul.f32 %v1559, %v1591
      %v1596 = vmul.f32 %v1560, %v1591
      %v1597 = vmul.f32 %v1561, %v1591
      %v1598 = vmul.f32 %v1562, %v1591
      %v1599 = vmul.f32 %v1563, %v1591
      %v1600 = vmul.f32 %v1564, %v1591
      %v1601 = vmul.f32 %v1565, %v1591
      %v1602 = vmul.f32 %v1566, %v1591
      %v1603 = vmul.f32 %v1567, %v1591
      %v1604 = vmul.f32 %v1568, %v1591
      %v1605 = vmul.f32 %v1569, %v1591
      %v1606 = vmul.f32 %v1570, %v1591
      %v1607 = vmul.f32 %v1571, %v1591
      %v1608 = vmul.f32 %v1572, %v1591
      %v1609 = vmul.f32 %v1573, %v1591
      %v1610 = vmul.f32 %v1574, %v1591
      %v1611 = vmul.f32 %v1575, %v1591
      %v1612 = vmul.f32 %v1576, %v1591
      %v1613 = vmul.f32 %v1577, %v1591
      %v1614 = vmul.f32 %v1578, %v1591
      %v1615 = vmul.f32 %v1579, %v1591
      %v1616 = vmul.f32 %v1580, %v1591
      %v1617 = vmul.f32 %v1581, %v1591
      %v1618 = vmul.f32 %v1582, %v1591
      %v1619 = vmul.f32 %v1583, %v1591
      %v1620 = vmul.f32 %v1584, %v1591
      %v1621 = vmul.f32 %v1585, %v1591
      %v1622 = vmul.f32 %v1586, %v1591
      %v1623 = vmul.f32 %v1587, %v1591
      %v1624 = vmul.f32 %v1588, %v1591
      %v1625 = vld [vmem:[%s6] sm:$0x1]
      %v1627 = vperm.slane %v1625, 0
      %v1629 = vadd.f32 %v1593, %v1627
      %v1630 = vadd.f32 %v1594, %v1627
      %v1631 = vadd.f32 %v1595, %v1627
      %v1632 = vadd.f32 %v1596, %v1627
      %v1633 = vadd.f32 %v1597, %v1627
      %v1634 = vadd.f32 %v1598, %v1627
      %v1635 = vadd.f32 %v1599, %v1627
      %v1636 = vadd.f32 %v1600, %v1627
      %v1637 = vadd.f32 %v1601, %v1627
      %v1638 = vadd.f32 %v1602, %v1627
      %v1639 = vadd.f32 %v1603, %v1627
      %v1640 = vadd.f32 %v1604, %v1627
      %v1641 = vadd.f32 %v1605, %v1627
      %v1642 = vadd.f32 %v1606, %v1627
      %v1643 = vadd.f32 %v1607, %v1627
      %v1644 = vadd.f32 %v1608, %v1627
      %v1645 = vadd.f32 %v1609, %v1627
      %v1646 = vadd.f32 %v1610, %v1627
      %v1647 = vadd.f32 %v1611, %v1627
      %v1648 = vadd.f32 %v1612, %v1627
      %v1649 = vadd.f32 %v1613, %v1627
      %v1650 = vadd.f32 %v1614, %v1627
      %v1651 = vadd.f32 %v1615, %v1627
      %v1652 = vadd.f32 %v1616, %v1627
      %v1653 = vadd.f32 %v1617, %v1627
      %v1654 = vadd.f32 %v1618, %v1627
      %v1655 = vadd.f32 %v1619, %v1627
      %v1656 = vadd.f32 %v1620, %v1627
      %v1657 = vadd.f32 %v1621, %v1627
      %v1658 = vadd.f32 %v1622, %v1627
      %v1659 = vadd.f32 %v1623, %v1627
      %v1660 = vadd.f32 %v1624, %v1627
      %v1661 = vld [vmem:[%s7] sm:$0xff]
      %v1662 = vld [vmem:[%s7 + $0x8] sm:$0xff]
      %v1663 = vld [vmem:[%s7 + $0x10] sm:$0xff]
      %v1664 = vld [vmem:[%s7 + $0x18] sm:$0xff]
      %v1665 = vld [vmem:[%s7 + $0x20] sm:$0xff]
      %v1666 = vld [vmem:[%s7 + $0x28] sm:$0xff]
      %v1667 = vld [vmem:[%s7 + $0x30] sm:$0xff]
      %v1668 = vld [vmem:[%s7 + $0x38] sm:$0xff]
      %v1669 = vld [vmem:[%s7 + $0x40] sm:$0xff]
      %v1670 = vld [vmem:[%s7 + $0x48] sm:$0xff]
      %v1671 = vld [vmem:[%s7 + $0x50] sm:$0xff]
      %v1672 = vld [vmem:[%s7 + $0x58] sm:$0xff]
      %v1673 = vld [vmem:[%s7 + $0x60] sm:$0xff]
      %v1674 = vld [vmem:[%s7 + $0x68] sm:$0xff]
      %v1675 = vld [vmem:[%s7 + $0x70] sm:$0xff]
      %v1676 = vld [vmem:[%s7 + $0x78] sm:$0xff]
      %1677 = vmatpush.msra.mxu0 %v1676
      %1678 = vmatpush.msra.mxu0 %v1675
      %1679 = vmatpush.msra.mxu0 %v1674
      %1680 = vmatpush.msra.mxu0 %v1673
      %1681 = vmatpush.msra.mxu0 %v1672
      %1682 = vmatpush.msra.mxu0 %v1671
      %1683 = vmatpush.msra.mxu0 %v1670
      %1684 = vmatpush.msra.mxu0 %v1669
      %1685 = vmatpush.msra.mxu0 %v1668
      %1686 = vmatpush.msra.mxu0 %v1667
      %1687 = vmatpush.msra.mxu0 %v1666
      %1688 = vmatpush.msra.mxu0 %v1665
      %1689 = vmatpush.msra.mxu0 %v1664
      %1690 = vmatpush.msra.mxu0 %v1663
      %1691 = vmatpush.msra.mxu0 %v1662
      %1692 = vmatpush.msra.mxu0 %v1661
      %1693 = vmatmul.f32.gmra.mxu0 %v1629
      %v1694 = vpop.f32.mrf.mxu0
      %v1695 = vadd.f32 0.0, %v1694
      %1696 = vmatmul.f32.gmra.mxu0 %v1630
      %v1697 = vpop.f32.mrf.mxu0
      %v1698 = vadd.f32 0.0, %v1697
      %1699 = vmatmul.f32.gmra.mxu0 %v1631
      %v1700 = vpop.f32.mrf.mxu0
      %v1701 = vadd.f32 0.0, %v1700
      %1702 = vmatmul.f32.gmra.mxu0 %v1632
      %v1703 = vpop.f32.mrf.mxu0
      %v1704 = vadd.f32 0.0, %v1703
      %1705 = vmatmul.f32.gmra.mxu0 %v1633
      %v1706 = vpop.f32.mrf.mxu0
      %v1707 = vadd.f32 0.0, %v1706
      %1708 = vmatmul.f32.gmra.mxu0 %v1634
      %v1709 = vpop.f32.mrf.mxu0
      %v1710 = vadd.f32 0.0, %v1709
      %1711 = vmatmul.f32.gmra.mxu0 %v1635
      %v1712 = vpop.f32.mrf.mxu0
      %v1713 = vadd.f32 0.0, %v1712
      %1714 = vmatmul.f32.gmra.mxu0 %v1636
      %v1715 = vpop.f32.mrf.mxu0
      %v1716 = vadd.f32 0.0, %v1715
      %1717 = vmatmul.f32.gmra.mxu0 %v1637
      %v1718 = vpop.f32.mrf.mxu0
      %v1719 = vadd.f32 0.0, %v1718
      %1720 = vmatmul.f32.gmra.mxu0 %v1638
      %v1721 = vpop.f32.mrf.mxu0
      %v1722 = vadd.f32 0.0, %v1721
      %1723 = vmatmul.f32.gmra.mxu0 %v1639
      %v1724 = vpop.f32.mrf.mxu0
      %v1725 = vadd.f32 0.0, %v1724
      %1726 = vmatmul.f32.gmra.mxu0 %v1640
      %v1727 = vpop.f32.mrf.mxu0
      %v1728 = vadd.f32 0.0, %v1727
      %1729 = vmatmul.f32.gmra.mxu0 %v1641
      %v1730 = vpop.f32.mrf.mxu0
      %v1731 = vadd.f32 0.0, %v1730
      %1732 = vmatmul.f32.gmra.mxu0 %v1642
      %v1733 = vpop.f32.mrf.mxu0
      %v1734 = vadd.f32 0.0, %v1733
      %1735 = vmatmul.f32.gmra.mxu0 %v1643
      %v1736 = vpop.f32.mrf.mxu0
      %v1737 = vadd.f32 0.0, %v1736
      %1738 = vmatmul.f32.gmra.mxu0 %v1644
      %v1739 = vpop.f32.mrf.mxu0
      %v1740 = vadd.f32 0.0, %v1739
      %1741 = vmatmul.f32.gmra.mxu0 %v1645
      %v1742 = vpop.f32.mrf.mxu0
      %v1743 = vadd.f32 0.0, %v1742
      %1744 = vmatmul.f32.gmra.mxu0 %v1646
      %v1745 = vpop.f32.mrf.mxu0
      %v1746 = vadd.f32 0.0, %v1745
      %1747 = vmatmul.f32.gmra.mxu0 %v1647
      %v1748 = vpop.f32.mrf.mxu0
      %v1749 = vadd.f32 0.0, %v1748
      %1750 = vmatmul.f32.gmra.mxu0 %v1648
      %v1751 = vpop.f32.mrf.mxu0
      %v1752 = vadd.f32 0.0, %v1751
      %1753 = vmatmul.f32.gmra.mxu0 %v1649
      %v1754 = vpop.f32.mrf.mxu0
      %v1755 = vadd.f32 0.0, %v1754
      %1756 = vmatmul.f32.gmra.mxu0 %v1650
      %v1757 = vpop.f32.mrf.mxu0
      %v1758 = vadd.f32 0.0, %v1757
      %1759 = vmatmul.f32.gmra.mxu0 %v1651
      %v1760 = vpop.f32.mrf.mxu0
      %v1761 = vadd.f32 0.0, %v1760
      %1762 = vmatmul.f32.gmra.mxu0 %v1652
      %v1763 = vpop.f32.mrf.mxu0
      %v1764 = vadd.f32 0.0, %v1763
      %1765 = vmatmul.f32.gmra.mxu0 %v1653
      %v1766 = vpop.f32.mrf.mxu0
      %v1767 = vadd.f32 0.0, %v1766
      %1768 = vmatmul.f32.gmra.mxu0 %v1654
      %v1769 = vpop.f32.mrf.mxu0
      %v1770 = vadd.f32 0.0, %v1769
      %1771 = vmatmul.f32.gmra.mxu0 %v1655
      %v1772 = vpop.f32.mrf.mxu0
      %v1773 = vadd.f32 0.0, %v1772
      %1774 = vmatmul.f32.gmra.mxu0 %v1656
      %v1775 = vpop.f32.mrf.mxu0
      %v1776 = vadd.f32 0.0, %v1775
      %1777 = vmatmul.f32.gmra.mxu0 %v1657
      %v1778 = vpop.f32.mrf.mxu0
      %v1779 = vadd.f32 0.0, %v1778
      %1780 = vmatmul.f32.gmra.mxu0 %v1658
      %v1781 = vpop.f32.mrf.mxu0
      %v1782 = vadd.f32 0.0, %v1781
      %1783 = vmatmul.f32.gmra.mxu0 %v1659
      %v1784 = vpop.f32.mrf.mxu0
      %v1785 = vadd.f32 0.0, %v1784
      %1786 = vmatmul.f32.gmra.mxu0 %v1660
      %v1787 = vpop.f32.mrf.mxu0
      %v1788 = vadd.f32 0.0, %v1787
      %1789 = vdwg.mxu0
      %v1790 = vld [vmem:[%s8] sm:$0x1]
      %v1792 = vperm.slane %v1790, 0
      %v1794 = vmul.f32 %v1695, %v1792
      %v1795 = vmul.f32 %v1698, %v1792
      %v1796 = vmul.f32 %v1701, %v1792
      %v1797 = vmul.f32 %v1704, %v1792
      %v1798 = vmul.f32 %v1707, %v1792
      %v1799 = vmul.f32 %v1710, %v1792
      %v1800 = vmul.f32 %v1713, %v1792
      %v1801 = vmul.f32 %v1716, %v1792
      %v1802 = vmul.f32 %v1719, %v1792
      %v1803 = vmul.f32 %v1722, %v1792
      %v1804 = vmul.f32 %v1725, %v1792
      %v1805 = vmul.f32 %v1728, %v1792
      %v1806 = vmul.f32 %v1731, %v1792
      %v1807 = vmul.f32 %v1734, %v1792
      %v1808 = vmul.f32 %v1737, %v1792
      %v1809 = vmul.f32 %v1740, %v1792
      %v1810 = vmul.f32 %v1743, %v1792
      %v1811 = vmul.f32 %v1746, %v1792
      %v1812 = vmul.f32 %v1749, %v1792
      %v1813 = vmul.f32 %v1752, %v1792
      %v1814 = vmul.f32 %v1755, %v1792
      %v1815 = vmul.f32 %v1758, %v1792
      %v1816 = vmul.f32 %v1761, %v1792
      %v1817 = vmul.f32 %v1764, %v1792
      %v1818 = vmul.f32 %v1767, %v1792
      %v1819 = vmul.f32 %v1770, %v1792
      %v1820 = vmul.f32 %v1773, %v1792
      %v1821 = vmul.f32 %v1776, %v1792
      %v1822 = vmul.f32 %v1779, %v1792
      %v1823 = vmul.f32 %v1782, %v1792
      %v1824 = vmul.f32 %v1785, %v1792
      %v1825 = vmul.f32 %v1788, %v1792
      %v1826 = vld [vmem:[%s9] sm:$0x1]
      %v1828 = vperm.slane %v1826, 0
      %v1830 = vadd.f32 %v1794, %v1828
      %v1831 = vadd.f32 %v1795, %v1828
      %v1832 = vadd.f32 %v1796, %v1828
      %v1833 = vadd.f32 %v1797, %v1828
      %v1834 = vadd.f32 %v1798, %v1828
      %v1835 = vadd.f32 %v1799, %v1828
      %v1836 = vadd.f32 %v1800, %v1828
      %v1837 = vadd.f32 %v1801, %v1828
      %v1838 = vadd.f32 %v1802, %v1828
      %v1839 = vadd.f32 %v1803, %v1828
      %v1840 = vadd.f32 %v1804, %v1828
      %v1841 = vadd.f32 %v1805, %v1828
      %v1842 = vadd.f32 %v1806, %v1828
      %v1843 = vadd.f32 %v1807, %v1828
      %v1844 = vadd.f32 %v1808, %v1828
      %v1845 = vadd.f32 %v1809, %v1828
      %v1846 = vadd.f32 %v1810, %v1828
      %v1847 = vadd.f32 %v1811, %v1828
      %v1848 = vadd.f32 %v1812, %v1828
      %v1849 = vadd.f32 %v1813, %v1828
      %v1850 = vadd.f32 %v1814, %v1828
      %v1851 = vadd.f32 %v1815, %v1828
      %v1852 = vadd.f32 %v1816, %v1828
      %v1853 = vadd.f32 %v1817, %v1828
      %v1854 = vadd.f32 %v1818, %v1828
      %v1855 = vadd.f32 %v1819, %v1828
      %v1856 = vadd.f32 %v1820, %v1828
      %v1857 = vadd.f32 %v1821, %v1828
      %v1858 = vadd.f32 %v1822, %v1828
      %v1859 = vadd.f32 %v1823, %v1828
      %v1860 = vadd.f32 %v1824, %v1828
      %v1861 = vadd.f32 %v1825, %v1828
      %v1862 = vmax.f32 %v1830, 0.0
      %v1863 = vmax.f32 %v1831, 0.0
      %v1864 = vmax.f32 %v1832, 0.0
      %v1865 = vmax.f32 %v1833, 0.0
      %v1866 = vmax.f32 %v1834, 0.0
      %v1867 = vmax.f32 %v1835, 0.0
      %v1868 = vmax.f32 %v1836, 0.0
      %v1869 = vmax.f32 %v1837, 0.0
      %v1870 = vmax.f32 %v1838, 0.0
      %v1871 = vmax.f32 %v1839, 0.0
      %v1872 = vmax.f32 %v1840, 0.0
      %v1873 = vmax.f32 %v1841, 0.0
      %v1874 = vmax.f32 %v1842, 0.0
      %v1875 = vmax.f32 %v1843, 0.0
      %v1876 = vmax.f32 %v1844, 0.0
      %v1877 = vmax.f32 %v1845, 0.0
      %v1878 = vmax.f32 %v1846, 0.0
      %v1879 = vmax.f32 %v1847, 0.0
      %v1880 = vmax.f32 %v1848, 0.0
      %v1881 = vmax.f32 %v1849, 0.0
      %v1882 = vmax.f32 %v1850, 0.0
      %v1883 = vmax.f32 %v1851, 0.0
      %v1884 = vmax.f32 %v1852, 0.0
      %v1885 = vmax.f32 %v1853, 0.0
      %v1886 = vmax.f32 %v1854, 0.0
      %v1887 = vmax.f32 %v1855, 0.0
      %v1888 = vmax.f32 %v1856, 0.0
      %v1889 = vmax.f32 %v1857, 0.0
      %v1890 = vmax.f32 %v1858, 0.0
      %v1891 = vmax.f32 %v1859, 0.0
      %v1892 = vmax.f32 %v1860, 0.0
      %v1893 = vmax.f32 %v1861, 0.0
      %1894 = vst [vmem:[%s359] sm:$0xff] %v1862
      %1895 = vst [vmem:[%s359 + $0x8] sm:$0xff] %v1863
      %1896 = vst [vmem:[%s359 + $0x10] sm:$0xff] %v1864
      %1897 = vst [vmem:[%s359 + $0x18] sm:$0xff] %v1865
      %1898 = vst [vmem:[%s359 + $0x20] sm:$0xff] %v1866
      %1899 = vst [vmem:[%s359 + $0x28] sm:$0xff] %v1867
      %1900 = vst [vmem:[%s359 + $0x30] sm:$0xff] %v1868
      %1901 = vst [vmem:[%s359 + $0x38] sm:$0xff] %v1869
      %1902 = vst [vmem:[%s359 + $0x40] sm:$0xff] %v1870
      %1903 = vst [vmem:[%s359 + $0x48] sm:$0xff] %v1871
      %1904 = vst [vmem:[%s359 + $0x50] sm:$0xff] %v1872
      %1905 = vst [vmem:[%s359 + $0x58] sm:$0xff] %v1873
      %1906 = vst [vmem:[%s359 + $0x60] sm:$0xff] %v1874
      %1907 = vst [vmem:[%s359 + $0x68] sm:$0xff] %v1875
      %1908 = vst [vmem:[%s359 + $0x70] sm:$0xff] %v1876
      %1909 = vst [vmem:[%s359 + $0x78] sm:$0xff] %v1877
      %1910 = vst [vmem:[%s359 + $0x80] sm:$0xff] %v1878
      %1911 = vst [vmem:[%s359 + $0x88] sm:$0xff] %v1879
      %1912 = vst [vmem:[%s359 + $0x90] sm:$0xff] %v1880
      %1913 = vst [vmem:[%s359 + $0x98] sm:$0xff] %v1881
      %1914 = vst [vmem:[%s359 + $0xa0] sm:$0xff] %v1882
      %1915 = vst [vmem:[%s359 + $0xa8] sm:$0xff] %v1883
      %1916 = vst [vmem:[%s359 + $0xb0] sm:$0xff] %v1884
      %1917 = vst [vmem:[%s359 + $0xb8] sm:$0xff] %v1885
      %1918 = vst [vmem:[%s359 + $0xc0] sm:$0xff] %v1886
      %1919 = vst [vmem:[%s359 + $0xc8] sm:$0xff] %v1887
      %1920 = vst [vmem:[%s359 + $0xd0] sm:$0xff] %v1888
      %1921 = vst [vmem:[%s359 + $0xd8] sm:$0xff] %v1889
      %1922 = vst [vmem:[%s359 + $0xe0] sm:$0xff] %v1890
      %1923 = vst [vmem:[%s359 + $0xe8] sm:$0xff] %v1891
      %1924 = vst [vmem:[%s359 + $0xf0] sm:$0xff] %v1892
      %1925 = vst [vmem:[%s359 + $0xf8] sm:$0xff] %v1893
      %p1926 = scmp.lt.s32.totalorder %s21, 1
      %s1927 = scalar_select %p1926, %s21, 1
      %s1928 = smul.addr %s1927, 32
      %s1929 = smul.addr %s1928, 8
      %s1930 = scalar_lea.vmem %s10, %s1929
      // Predicated region
      $region61: #{shufflenet_invres_forward.1} parent=59 // pred_check
        %p1931 = pneg %p254
      $region62: #{shufflenet_invres_forward.1} parent=59 // pred_check_branch
        %1933 = sbr.rel (%p1931) target = $region64
      $region63: #{shufflenet_invres_forward.1} parent=59 // pred_region
        _
      $region64: #{shufflenet_invres_forward.1} parent=59 // pred_fallthru
        _
    $region60: #{shufflenet_invres_forward.1} parent=5 // pred_fallthru
      _
    %p1934 = scmp.le.s32.totalorder 2, %s16
    // Predicated region
    $region65: #{shufflenet_invres_forward.1} parent=5 // pred_check
      %p1935 = pneg %p1934
    $region66: #{shufflenet_invres_forward.1} parent=5 // pred_check_branch
      %1937 = sbr.rel (%p1935) target = $region68
    $region67: #{shufflenet_invres_forward.1} parent=5 // pred_region
      %s1938 = ssub.s32 %s16, 2
      // Predicated region
      $region69: #{shufflenet_invres_forward.1} parent=67 // pred_check
        %p1939 = pneg %p260
      $region70: #{shufflenet_invres_forward.1} parent=67 // pred_check_branch
        %1941 = sbr.rel (%p1939) target = $region72
      $region71: #{shufflenet_invres_forward.1} parent=67 // pred_region
        %p1942 = scmp.lt.s32.totalorder %s22, 1
        %s1943 = scalar_select %p1942, %s22, 1
        %s1944 = smul.addr %s1943, 32
        %s1945 = smul.addr %s1944, 8
        %s1946 = scalar_lea.vmem %s10, %s1945
      $region72: #{shufflenet_invres_forward.1} parent=67 // pred_fallthru
        _
    $region68: #{shufflenet_invres_forward.1} parent=5 // pred_fallthru
      _
  $region6: #{shufflenet_invres_forward.1} parent=0 // loop_footer
    %s20 = sadd.s32 1, %s16
  $region7: #{shufflenet_invres_forward.1} parent=0 // loop_footer_branch
    %15 = sbr.rel target = $region3
  $region8: #{shufflenet_invres_forward.1} parent=0 // loop_exit
    _

</llo_original>
